<compile_context>
chip_gen: v6e
topology: v6e:2x2x1
jax: 0.10.0
libtpu: 0.0.40
codegen_flags: <defaults>
</compile_context>

<pallas_src>
import functools

import numpy as np
import jax
import jax.numpy as jnp
from jax import lax
from jax.experimental import pallas as pl
from jax.experimental.pallas import tpu as pltpu

# ---- shapes implied by the module (fc1 in_features = 6400 = 16*20*20 -> 28x28 input)
IMG = 28
K = 5
C1_OUT, C2_OUT = 6, 16
H1 = IMG - K + 1               # 24  (conv1 output spatial)
H2 = H1 - K + 1                # 20  (conv2 output spatial)
ROW1 = H1 * C1_OUT             # 144 (conv1 row layout: j*C1_OUT + co)
ROW2 = H2 * C2_OUT             # 320 (conv2 row layout: j*C2_OUT + co)
FC1_IN = C2_OUT * H2 * H2      # 6400
FC1_OUT, FC2_OUT, FC3_OUT = 120, 84, 10

# MXU-native operand dtype for the big matmuls (f32 accumulation everywhere).
MXU_DTYPE = jnp.bfloat16


# ----------------------------------------------------------------------------
# Single fused kernel: whole network for one batch block.
# ----------------------------------------------------------------------------
def _net_kernel(x_ref, m1_ref, cb1_ref, m2_ref, cb2_ref,
                w1_ref, b1_ref, w2_ref, b2_ref, w3_ref, b3_ref,
                o_ref, h1_ref, fc1_ref):
    # x_ref  : (28, B, 28)    bf16  image rows first, batch in the middle (MXU M dim)
    # m1_ref : (5, 28, 144)   bf16  conv1 banded matrices, one per kernel row kh
    # cb1_ref: (1, 144)       f32   conv1 bias tiled along the row layout
    # m2_ref : (5, 144, 320)  bf16  conv2 banded matrices
    # cb2_ref: (1, 320)       f32
    # w1_ref : (20, 320, 120) bf16  fc1 weight (HWC row order), chunked by conv2 row
    # b1_ref : (1, 120)       f32
    # w2_ref : (120, 84)      f32
    # b2_ref : (1, 84)        f32
    # w3_ref : (84, 10)       f32
    # b3_ref : (1, 10)        f32
    # o_ref  : (B, 10)        f32   network output
    # h1_ref : (24, B, 144)   bf16  VMEM scratch: relu(conv1) rows
    # fc1_ref: (B, 120)       f32   VMEM scratch: fc1 accumulator
    cb1 = cb1_ref[...]
    cb2 = cb2_ref[...]

    # --- conv1 + ReLU: one batch-as-M matmul per (output row, kh) -------------
    def conv1_row(i, carry):
        acc = jnp.dot(x_ref[i], m1_ref[0], preferred_element_type=jnp.float32)
        for kh in range(1, K):
            acc += jnp.dot(x_ref[i + kh], m1_ref[kh],
                           preferred_element_type=jnp.float32)
        h1_ref[i] = jnp.maximum(acc + cb1, 0.0).astype(h1_ref.dtype)
        return carry

    lax.fori_loop(0, H1, conv1_row, 0)

    # --- conv2 + ReLU fused with the fc1 partial contraction ------------------
    fc1_ref[...] = jnp.zeros_like(fc1_ref)

    def conv2_row(i, carry):
        acc = jnp.dot(h1_ref[i], m2_ref[0], preferred_element_type=jnp.float32)
        for kh in range(1, K):
            acc += jnp.dot(h1_ref[i + kh], m2_ref[kh],
                           preferred_element_type=jnp.float32)
        row = jnp.maximum(acc + cb2, 0.0).astype(MXU_DTYPE)       # (B, 320) bf16
        fc1_ref[...] += jnp.dot(row, w1_ref[i],
                                preferred_element_type=jnp.float32)
        return carry

    lax.fori_loop(0, H2, conv2_row, 0)

    # --- fc tail (tiny; plain f32 as in PyTorch) ------------------------------
    h = jnp.maximum(fc1_ref[...] + b1_ref[...], 0.0)
    h = jnp.maximum(jnp.dot(h, w2_ref[...], preferred_element_type=jnp.float32)
                    + b2_ref[...], 0.0)
    out = jnp.dot(h, w3_ref[...], preferred_element_type=jnp.float32) + b3_ref[...]
    # 10-lane output is a masked store; padding to 128 lanes only matters at very
    # large batch (low priority per review), so keep the natural (B, 10) layout.
    o_ref[...] = out.astype(o_ref.dtype)


def _net_pallas(x_rows, kp, *, batch_tile):
    """x_rows: (28, N, 28) bf16 -> (N, 10) f32."""
    n = x_rows.shape[1]
    bt = min(batch_tile, n)
    if bt < n:
        bt = max(8, (bt // 8) * 8)      # blocked batch dim must be a multiple of 8
    grid = (pl.cdiv(n, bt),)
    return pl.pallas_call(
        _net_kernel,
        out_shape=jax.ShapeDtypeStruct((n, FC3_OUT), jnp.float32),
        grid_spec=pltpu.PrefetchScalarGridSpec(
            num_scalar_prefetch=0,
            grid=grid,
            in_specs=[
                pl.BlockSpec((IMG, bt, IMG), lambda i: (0, i, 0)),
                pl.BlockSpec((K, IMG, ROW1), lambda i: (0, 0, 0)),
                pl.BlockSpec((1, ROW1), lambda i: (0, 0)),
                pl.BlockSpec((K, ROW1, ROW2), lambda i: (0, 0, 0)),
                pl.BlockSpec((1, ROW2), lambda i: (0, 0)),
                pl.BlockSpec((H2, ROW2, FC1_OUT), lambda i: (0, 0, 0)),
                pl.BlockSpec((1, FC1_OUT), lambda i: (0, 0)),
                pl.BlockSpec((FC1_OUT, FC2_OUT), lambda i: (0, 0)),
                pl.BlockSpec((1, FC2_OUT), lambda i: (0, 0)),
                pl.BlockSpec((FC2_OUT, FC3_OUT), lambda i: (0, 0)),
                pl.BlockSpec((1, FC3_OUT), lambda i: (0, 0)),
            ],
            out_specs=pl.BlockSpec((bt, FC3_OUT), lambda i: (i, 0)),
            scratch_shapes=[
                pltpu.VMEM((H1, bt, ROW1), MXU_DTYPE),      # relu(conv1) rows
                pltpu.VMEM((bt, FC1_OUT), jnp.float32),     # fc1 accumulator
            ],
        ),
        compiler_params=pltpu.CompilerParams(
            dimension_semantics=("parallel",)),
    )(x_rows, kp["m1"], kp["cb1"], kp["m2"], kp["cb2"],
      kp["w1"], kp["b1"], kp["w2"], kp["b2"], kp["w3"], kp["b3"])


# ----------------------------------------------------------------------------
# Forward pass wrapper.
# ----------------------------------------------------------------------------
@functools.partial(jax.jit, static_argnames=("batch_tile",))
def net_forward(kp, x_nchw, batch_tile=128):
    # Default batch_tile=128 keeps per-row (B,320) f32 accumulators at ~48 vregs
    # (review's vreg-pressure note); 256 also fits VMEM on all generations.
    n = x_nchw.shape[0]
    assert x_nchw.shape[1:] == (1, IMG, IMG), x_nchw.shape
    # Cin == 1: NCHW -> (N, 28, 28) is a free reshape.  One tiny XLA op then puts
    # image rows first / batch in the middle and casts to bf16, so x_ref[i + kh]
    # is a contiguous (B, 28) MXU operand inside the kernel.
    x_rows = jnp.transpose(x_nchw.reshape(n, IMG, IMG), (1, 0, 2)).astype(MXU_DTYPE)
    return _net_pallas(x_rows, kp, batch_tile=batch_tile)


# ----------------------------------------------------------------------------
# Parameter construction (PyTorch layouts) and one-time kernel-layout prep.
# ----------------------------------------------------------------------------
def init_torch_like_params(key):
    """Random params in PyTorch layouts: conv (Cout,Cin,KH,KW), linear (out,in)."""
    ks = jax.random.split(key, 10)

    def u(k, shape, fan_in):
        bound = 1.0 / np.sqrt(fan_in)
        return jax.random.uniform(k, shape, jnp.float32, -bound, bound)

    return {
        "conv1_w": u(ks[0], (C1_OUT, 1, K, K), 1 * K * K),
        "conv1_b": u(ks[1], (C1_OUT,), 1 * K * K),
        "conv2_w": u(ks[2], (C2_OUT, C1_OUT, K, K), C1_OUT * K * K),
        "conv2_b": u(ks[3], (C2_OUT,), C1_OUT * K * K),
        "fc1_w": u(ks[4], (FC1_OUT, FC1_IN), FC1_IN),
        "fc1_b": u(ks[5], (FC1_OUT,), FC1_IN),
        "fc2_w": u(ks[6], (FC2_OUT, FC1_OUT), FC1_OUT),
        "fc2_b": u(ks[7], (FC2_OUT,), FC1_OUT),
        "fc3_w": u(ks[8], (FC3_OUT, FC2_OUT), FC2_OUT),
        "fc3_b": u(ks[9], (FC3_OUT,), FC2_OUT),
    }


def _conv_to_banded(w_oihw, w_in):
    """Rewrite a VALID/stride-1 conv as KH banded matmul matrices.

    Returns M of shape (KH, w_in*Cin, Wo*Cout) such that for an input whose rows
    are laid out X[i, j*Cin + ci] = inp[ci, i, j]:
        out[i, j*Cout + co] = sum_kh (X[i+kh, :] @ M[kh])[j*Cout + co]
    equals the PyTorch conv output out[co, i, j].
    """
    w = np.asarray(w_oihw, np.float32)
    cout, cin, kh_n, kw_n = w.shape
    wo = w_in - kw_n + 1
    m = np.zeros((kh_n, w_in * cin, wo * cout), np.float32)
    for kh in range(kh_n):
        for kw in range(kw_n):
            blk = w[:, :, kh, kw].T                          # (Cin, Cout)
            for j in range(wo):
                r0 = (j + kw) * cin
                c0 = j * cout
                m[kh, r0:r0 + cin, c0:c0 + cout] = blk
    return m


def prepare_params(p):
    """One-time conversion from PyTorch-layout params to kernel-ready params."""
    m1 = _conv_to_banded(p["conv1_w"], IMG)                  # (5, 28, 144)
    m2 = _conv_to_banded(p["conv2_w"], H1)                   # (5, 144, 320)
    cb1 = np.tile(np.asarray(p["conv1_b"], np.float32), H1)[None, :]   # (1, 144)
    cb2 = np.tile(np.asarray(p["conv2_b"], np.float32), H2)[None, :]   # (1, 320)

    # fc1: permute rows from torch CHW-flatten order to the kernel's HWC order and
    # chunk by conv2 output row (h), done exactly once here (zero runtime cost).
    w1 = np.asarray(p["fc1_w"], np.float32).reshape(FC1_OUT, C2_OUT, H2, H2)
    w1 = np.transpose(w1, (2, 3, 1, 0)).reshape(H2, ROW2, FC1_OUT)     # (20, 320, 120)

    return {
        "m1": jnp.asarray(m1, MXU_DTYPE), "cb1": jnp.asarray(cb1),
        "m2": jnp.asarray(m2, MXU_DTYPE), "cb2": jnp.asarray(cb2),
        "w1": jnp.asarray(w1, MXU_DTYPE),
        "b1": jnp.asarray(np.asarray(p["fc1_b"], np.float32)[None, :]),
        "w2": jnp.asarray(np.asarray(p["fc2_w"], np.float32).T),
        "b2": jnp.asarray(np.asarray(p["fc2_b"], np.float32)[None, :]),
        "w3": jnp.asarray(np.asarray(p["fc3_w"], np.float32).T),
        "b3": jnp.asarray(np.asarray(p["fc3_b"], np.float32)[None, :]),
    }


# ----------------------------------------------------------------------------
# Plain-JAX reference with the SAME precision policy as the kernel
# (bf16 conv/fc1 operands, f32 accumulation, f32 bias/ReLU, f32 fc2/fc3).
# ----------------------------------------------------------------------------
@jax.jit
def reference_forward(p, x_nchw):
    f32 = jnp.float32
    dn = ("NCHW", "OIHW", "NCHW")
    y = lax.conv_general_dilated(x_nchw.astype(MXU_DTYPE),
                                 p["conv1_w"].astype(MXU_DTYPE),
                                 (1, 1), "VALID", dimension_numbers=dn,
                                 preferred_element_type=f32)
    y = jnp.maximum(y + p["conv1_b"][None, :, None, None], 0.0)
    y = lax.conv_general_dilated(y.astype(MXU_DTYPE),
                                 p["conv2_w"].astype(MXU_DTYPE),
                                 (1, 1), "VALID", dimension_numbers=dn,
                                 preferred_element_type=f32)
    y = jnp.maximum(y + p["conv2_b"][None, :, None, None], 0.0)
    y = y.reshape(y.shape[0], -1)                            # torch.flatten(x, 1)
    h = jnp.dot(y.astype(MXU_DTYPE), p["fc1_w"].T.astype(MXU_DTYPE),
                preferred_element_type=f32)
    h = jnp.maximum(h + p["fc1_b"][None, :], 0.0)
    h = jnp.maximum(jnp.dot(h, p["fc2_w"].T, preferred_element_type=f32)
                    + p["fc2_b"][None, :], 0.0)
    return jnp.dot(h, p["fc3_w"].T, preferred_element_type=f32) + p["fc3_b"][None, :]


if __name__ == "__main__":
    key = jax.random.PRNGKey(0)
    pkey, xkey = jax.random.split(key)
    torch_params = init_torch_like_params(pkey)
    kparams = prepare_params(torch_params)

    # Input shape implied by fc1 in_features = 6400 -> 28x28 single-channel images.
    batch = 16
    x = jax.random.normal(xkey, (batch, 1, IMG, IMG), jnp.float32)

    out = jax.block_until_ready(net_forward(kparams, x))
    assert out.shape == (batch, FC3_OUT), out.shape
    assert bool(jnp.all(jnp.isfinite(out)))

    # Check against the precision-matched plain-JAX reference (the bf16 operand /
    # f32 accumulate policy is a deliberate, review-approved deviation from f32).
    ref = jax.block_until_ready(reference_forward(torch_params, x))
    np.testing.assert_allclose(np.asarray(out), np.asarray(ref), rtol=2e-2, atol=2e-2)

    print("KERNEL_OK")
</pallas_src>

<mosaic_0001>
module attributes {stable_mosaic.version = 11 : i64} {
  func.func @_net_kernel(%arg0: i32, %arg1: memref<28x16x28xbf16, #tpu.memory_space<vmem>>, %arg2: memref<5x28x144xbf16, #tpu.memory_space<vmem>>, %arg3: memref<1x144xf32, #tpu.memory_space<vmem>>, %arg4: memref<5x144x320xbf16, #tpu.memory_space<vmem>>, %arg5: memref<1x320xf32, #tpu.memory_space<vmem>>, %arg6: memref<20x320x120xbf16, #tpu.memory_space<vmem>>, %arg7: memref<1x120xf32, #tpu.memory_space<vmem>>, %arg8: memref<120x84xf32, #tpu.memory_space<vmem>>, %arg9: memref<1x84xf32, #tpu.memory_space<vmem>>, %arg10: memref<84x10xf32, #tpu.memory_space<vmem>>, %arg11: memref<1x10xf32, #tpu.memory_space<vmem>>, %arg12: memref<16x10xf32, #tpu.memory_space<vmem>>, %arg13: memref<24x16x144xbf16, #tpu.memory_space<vmem>>, %arg14: memref<16x120xf32, #tpu.memory_space<vmem>>) attributes {dimension_semantics = [#tpu.dimension_semantics<parallel>], iteration_bounds = array<i64: 1>, scalar_prefetch = 0 : i64, scratch_operands = 2 : i64, tpu.core_type = #tpu.core_type<tc>, window_params = [{transform_indices = @transform_0, window_bounds = array<i64: 28, 16, 28>}, {pipeline_mode = #tpu.pipeline_mode<synchronous>, transform_indices = @transform_1, window_bounds = array<i64: 5, 28, 144>}, {pipeline_mode = #tpu.pipeline_mode<synchronous>, transform_indices = @transform_2, window_bounds = array<i64: 1, 144>}, {pipeline_mode = #tpu.pipeline_mode<synchronous>, transform_indices = @transform_3, window_bounds = array<i64: 5, 144, 320>}, {pipeline_mode = #tpu.pipeline_mode<synchronous>, transform_indices = @transform_4, window_bounds = array<i64: 1, 320>}, {pipeline_mode = #tpu.pipeline_mode<synchronous>, transform_indices = @transform_5, window_bounds = array<i64: 20, 320, 120>}, {pipeline_mode = #tpu.pipeline_mode<synchronous>, transform_indices = @transform_6, window_bounds = array<i64: 1, 120>}, {pipeline_mode = #tpu.pipeline_mode<synchronous>, transform_indices = @transform_7, window_bounds = array<i64: 120, 84>}, {pipeline_mode = #tpu.pipeline_mode<synchronous>, transform_indices = @transform_8, window_bounds = array<i64: 1, 84>}, {pipeline_mode = #tpu.pipeline_mode<synchronous>, transform_indices = @transform_9, window_bounds = array<i64: 84, 10>}, {pipeline_mode = #tpu.pipeline_mode<synchronous>, transform_indices = @transform_10, window_bounds = array<i64: 1, 10>}, {transform_indices = @transform_11, window_bounds = array<i64: 16, 10>}]} {
    %c0 = arith.constant 0 : index
    %c0_0 = arith.constant 0 : index
    %0 = vector.load %arg3[%c0, %c0_0] : memref<1x144xf32, #tpu.memory_space<vmem>>, vector<1x144xf32>
    %c0_1 = arith.constant 0 : index
    %c0_2 = arith.constant 0 : index
    %1 = vector.load %arg5[%c0_1, %c0_2] : memref<1x320xf32, #tpu.memory_space<vmem>>, vector<1x320xf32>
    %c0_i32 = arith.constant 0 : i32
    %c24_i32 = arith.constant 24 : i32
    %2 = arith.addi %c0_i32, %c24_i32 : i32
    %c1_i32 = arith.constant 1 : i32
    scf.for %arg15 = %c0_i32 to %2 step %c1_i32  : i32 {
      %25 = arith.index_cast %arg15 : i32 to index
      %c0_27 = arith.constant 0 : index
      %c0_28 = arith.constant 0 : index
      %26 = vector.load %arg1[%25, %c0_27, %c0_28] : memref<28x16x28xbf16, #tpu.memory_space<vmem>>, vector<1x16x28xbf16>
      %27 = vector.shape_cast %26 : vector<1x16x28xbf16> to vector<16x28xbf16>
      %c0_29 = arith.constant 0 : index
      %c0_30 = arith.constant 0 : index
      %c0_31 = arith.constant 0 : index
      %28 = vector.load %arg2[%c0_29, %c0_30, %c0_31] : memref<5x28x144xbf16, #tpu.memory_space<vmem>>, vector<1x28x144xbf16>
      %29 = vector.shape_cast %28 : vector<1x28x144xbf16> to vector<28x144xbf16>
      %cst_32 = arith.constant dense<0.000000e+00> : vector<16x144xf32>
      %30 = tpu.matmul %27, %29, %cst_32 {dimension_numbers = #tpu.dot_dimension_numbers<[1], [0], [0], [1], [0, 0, 1, 1], [], []>} : vector<16x28xbf16>, vector<28x144xbf16>, vector<16x144xf32> -> vector<16x144xf32>
      %c1_i32_33 = arith.constant 1 : i32
      %31 = arith.addi %arg15, %c1_i32_33 : i32
      %32 = arith.index_cast %31 : i32 to index
      %c0_34 = arith.constant 0 : index
      %c0_35 = arith.constant 0 : index
      %33 = vector.load %arg1[%32, %c0_34, %c0_35] : memref<28x16x28xbf16, #tpu.memory_space<vmem>>, vector<1x16x28xbf16>
      %34 = vector.shape_cast %33 : vector<1x16x28xbf16> to vector<16x28xbf16>
      %c1 = arith.constant 1 : index
      %c0_36 = arith.constant 0 : index
      %c0_37 = arith.constant 0 : index
      %35 = vector.load %arg2[%c1, %c0_36, %c0_37] : memref<5x28x144xbf16, #tpu.memory_space<vmem>>, vector<1x28x144xbf16>
      %36 = vector.shape_cast %35 : vector<1x28x144xbf16> to vector<28x144xbf16>
      %cst_38 = arith.constant dense<0.000000e+00> : vector<16x144xf32>
      %37 = tpu.matmul %34, %36, %cst_38 {dimension_numbers = #tpu.dot_dimension_numbers<[1], [0], [0], [1], [0, 0, 1, 1], [], []>} : vector<16x28xbf16>, vector<28x144xbf16>, vector<16x144xf32> -> vector<16x144xf32>
      %38 = arith.addf %30, %37 : vector<16x144xf32>
      %c2_i32 = arith.constant 2 : i32
      %39 = arith.addi %arg15, %c2_i32 : i32
      %40 = arith.index_cast %39 : i32 to index
      %c0_39 = arith.constant 0 : index
      %c0_40 = arith.constant 0 : index
      %41 = vector.load %arg1[%40, %c0_39, %c0_40] : memref<28x16x28xbf16, #tpu.memory_space<vmem>>, vector<1x16x28xbf16>
      %42 = vector.shape_cast %41 : vector<1x16x28xbf16> to vector<16x28xbf16>
      %c2 = arith.constant 2 : index
      %c0_41 = arith.constant 0 : index
      %c0_42 = arith.constant 0 : index
      %43 = vector.load %arg2[%c2, %c0_41, %c0_42] : memref<5x28x144xbf16, #tpu.memory_space<vmem>>, vector<1x28x144xbf16>
      %44 = vector.shape_cast %43 : vector<1x28x144xbf16> to vector<28x144xbf16>
      %cst_43 = arith.constant dense<0.000000e+00> : vector<16x144xf32>
      %45 = tpu.matmul %42, %44, %cst_43 {dimension_numbers = #tpu.dot_dimension_numbers<[1], [0], [0], [1], [0, 0, 1, 1], [], []>} : vector<16x28xbf16>, vector<28x144xbf16>, vector<16x144xf32> -> vector<16x144xf32>
      %46 = arith.addf %38, %45 : vector<16x144xf32>
      %c3_i32 = arith.constant 3 : i32
      %47 = arith.addi %arg15, %c3_i32 : i32
      %48 = arith.index_cast %47 : i32 to index
      %c0_44 = arith.constant 0 : index
      %c0_45 = arith.constant 0 : index
      %49 = vector.load %arg1[%48, %c0_44, %c0_45] : memref<28x16x28xbf16, #tpu.memory_space<vmem>>, vector<1x16x28xbf16>
      %50 = vector.shape_cast %49 : vector<1x16x28xbf16> to vector<16x28xbf16>
      %c3 = arith.constant 3 : index
      %c0_46 = arith.constant 0 : index
      %c0_47 = arith.constant 0 : index
      %51 = vector.load %arg2[%c3, %c0_46, %c0_47] : memref<5x28x144xbf16, #tpu.memory_space<vmem>>, vector<1x28x144xbf16>
      %52 = vector.shape_cast %51 : vector<1x28x144xbf16> to vector<28x144xbf16>
      %cst_48 = arith.constant dense<0.000000e+00> : vector<16x144xf32>
      %53 = tpu.matmul %50, %52, %cst_48 {dimension_numbers = #tpu.dot_dimension_numbers<[1], [0], [0], [1], [0, 0, 1, 1], [], []>} : vector<16x28xbf16>, vector<28x144xbf16>, vector<16x144xf32> -> vector<16x144xf32>
      %54 = arith.addf %46, %53 : vector<16x144xf32>
      %c4_i32 = arith.constant 4 : i32
      %55 = arith.addi %arg15, %c4_i32 : i32
      %56 = arith.index_cast %55 : i32 to index
      %c0_49 = arith.constant 0 : index
      %c0_50 = arith.constant 0 : index
      %57 = vector.load %arg1[%56, %c0_49, %c0_50] : memref<28x16x28xbf16, #tpu.memory_space<vmem>>, vector<1x16x28xbf16>
      %58 = vector.shape_cast %57 : vector<1x16x28xbf16> to vector<16x28xbf16>
      %c4 = arith.constant 4 : index
      %c0_51 = arith.constant 0 : index
      %c0_52 = arith.constant 0 : index
      %59 = vector.load %arg2[%c4, %c0_51, %c0_52] : memref<5x28x144xbf16, #tpu.memory_space<vmem>>, vector<1x28x144xbf16>
      %60 = vector.shape_cast %59 : vector<1x28x144xbf16> to vector<28x144xbf16>
      %cst_53 = arith.constant dense<0.000000e+00> : vector<16x144xf32>
      %61 = tpu.matmul %58, %60, %cst_53 {dimension_numbers = #tpu.dot_dimension_numbers<[1], [0], [0], [1], [0, 0, 1, 1], [], []>} : vector<16x28xbf16>, vector<28x144xbf16>, vector<16x144xf32> -> vector<16x144xf32>
      %62 = arith.addf %54, %61 : vector<16x144xf32>
      %63 = vector.broadcast %0 : vector<1x144xf32> to vector<16x144xf32>
      %64 = arith.addf %62, %63 : vector<16x144xf32>
      %cst_54 = arith.constant 0.000000e+00 : f32
      %65 = vector.broadcast %cst_54 : f32 to vector<16x144xf32>
      %66 = arith.maximumf %64, %65 : vector<16x144xf32>
      %67 = arith.truncf %66 : vector<16x144xf32> to vector<16x144xbf16>
      %68 = arith.index_cast %arg15 : i32 to index
      %c0_55 = arith.constant 0 : index
      %c0_56 = arith.constant 0 : index
      %69 = vector.load %arg13[%68, %c0_55, %c0_56] : memref<24x16x144xbf16, #tpu.memory_space<vmem>>, vector<1x16x144xbf16>
      %70 = vector.shape_cast %69 : vector<1x16x144xbf16> to vector<16x144xbf16>
      %71 = vector.shape_cast %67 : vector<16x144xbf16> to vector<1x16x144xbf16>
      tpu.vector_store %arg13[%68, %c0_55, %c0_56], %71 {strides = array<i32>} : memref<24x16x144xbf16, #tpu.memory_space<vmem>>, vector<1x16x144xbf16>,
    }
    %c24_i32_3 = arith.constant 24 : i32
    %cst = arith.constant 0.000000e+00 : f32
    %3 = vector.broadcast %cst : f32 to vector<16x120xf32>
    %c0_4 = arith.constant 0 : index
    %c0_5 = arith.constant 0 : index
    %4 = vector.load %arg14[%c0_4, %c0_5] : memref<16x120xf32, #tpu.memory_space<vmem>>, vector<16x120xf32>
    tpu.vector_store %arg14[%c0_4, %c0_5], %3 {strides = array<i32>} : memref<16x120xf32, #tpu.memory_space<vmem>>, vector<16x120xf32>,
    %c0_i32_6 = arith.constant 0 : i32
    %c20_i32 = arith.constant 20 : i32
    %5 = arith.addi %c0_i32_6, %c20_i32 : i32
    %c1_i32_7 = arith.constant 1 : i32
    scf.for %arg15 = %c0_i32_6 to %5 step %c1_i32_7  : i32 {
      %25 = arith.index_cast %arg15 : i32 to index
      %c0_27 = arith.constant 0 : index
      %c0_28 = arith.constant 0 : index
      %26 = vector.load %arg13[%25, %c0_27, %c0_28] : memref<24x16x144xbf16, #tpu.memory_space<vmem>>, vector<1x16x144xbf16>
      %27 = vector.shape_cast %26 : vector<1x16x144xbf16> to vector<16x144xbf16>
      %c0_29 = arith.constant 0 : index
      %c0_30 = arith.constant 0 : index
      %c0_31 = arith.constant 0 : index
      %28 = vector.load %arg4[%c0_29, %c0_30, %c0_31] : memref<5x144x320xbf16, #tpu.memory_space<vmem>>, vector<1x144x320xbf16>
      %29 = vector.shape_cast %28 : vector<1x144x320xbf16> to vector<144x320xbf16>
      %cst_32 = arith.constant dense<0.000000e+00> : vector<16x320xf32>
      %30 = tpu.matmul %27, %29, %cst_32 {dimension_numbers = #tpu.dot_dimension_numbers<[1], [0], [0], [1], [0, 0, 1, 1], [], []>} : vector<16x144xbf16>, vector<144x320xbf16>, vector<16x320xf32> -> vector<16x320xf32>
      %c1_i32_33 = arith.constant 1 : i32
      %31 = arith.addi %arg15, %c1_i32_33 : i32
      %32 = arith.index_cast %31 : i32 to index
      %c0_34 = arith.constant 0 : index
      %c0_35 = arith.constant 0 : index
      %33 = vector.load %arg13[%32, %c0_34, %c0_35] : memref<24x16x144xbf16, #tpu.memory_space<vmem>>, vector<1x16x144xbf16>
      %34 = vector.shape_cast %33 : vector<1x16x144xbf16> to vector<16x144xbf16>
      %c1 = arith.constant 1 : index
      %c0_36 = arith.constant 0 : index
      %c0_37 = arith.constant 0 : index
      %35 = vector.load %arg4[%c1, %c0_36, %c0_37] : memref<5x144x320xbf16, #tpu.memory_space<vmem>>, vector<1x144x320xbf16>
      %36 = vector.shape_cast %35 : vector<1x144x320xbf16> to vector<144x320xbf16>
      %cst_38 = arith.constant dense<0.000000e+00> : vector<16x320xf32>
      %37 = tpu.matmul %34, %36, %cst_38 {dimension_numbers = #tpu.dot_dimension_numbers<[1], [0], [0], [1], [0, 0, 1, 1], [], []>} : vector<16x144xbf16>, vector<144x320xbf16>, vector<16x320xf32> -> vector<16x320xf32>
      %38 = arith.addf %30, %37 : vector<16x320xf32>
      %c2_i32 = arith.constant 2 : i32
      %39 = arith.addi %arg15, %c2_i32 : i32
      %40 = arith.index_cast %39 : i32 to index
      %c0_39 = arith.constant 0 : index
      %c0_40 = arith.constant 0 : index
      %41 = vector.load %arg13[%40, %c0_39, %c0_40] : memref<24x16x144xbf16, #tpu.memory_space<vmem>>, vector<1x16x144xbf16>
      %42 = vector.shape_cast %41 : vector<1x16x144xbf16> to vector<16x144xbf16>
      %c2 = arith.constant 2 : index
      %c0_41 = arith.constant 0 : index
      %c0_42 = arith.constant 0 : index
      %43 = vector.load %arg4[%c2, %c0_41, %c0_42] : memref<5x144x320xbf16, #tpu.memory_space<vmem>>, vector<1x144x320xbf16>
      %44 = vector.shape_cast %43 : vector<1x144x320xbf16> to vector<144x320xbf16>
      %cst_43 = arith.constant dense<0.000000e+00> : vector<16x320xf32>
      %45 = tpu.matmul %42, %44, %cst_43 {dimension_numbers = #tpu.dot_dimension_numbers<[1], [0], [0], [1], [0, 0, 1, 1], [], []>} : vector<16x144xbf16>, vector<144x320xbf16>, vector<16x320xf32> -> vector<16x320xf32>
      %46 = arith.addf %38, %45 : vector<16x320xf32>
      %c3_i32 = arith.constant 3 : i32
      %47 = arith.addi %arg15, %c3_i32 : i32
      %48 = arith.index_cast %47 : i32 to index
      %c0_44 = arith.constant 0 : index
      %c0_45 = arith.constant 0 : index
      %49 = vector.load %arg13[%48, %c0_44, %c0_45] : memref<24x16x144xbf16, #tpu.memory_space<vmem>>, vector<1x16x144xbf16>
      %50 = vector.shape_cast %49 : vector<1x16x144xbf16> to vector<16x144xbf16>
      %c3 = arith.constant 3 : index
      %c0_46 = arith.constant 0 : index
      %c0_47 = arith.constant 0 : index
      %51 = vector.load %arg4[%c3, %c0_46, %c0_47] : memref<5x144x320xbf16, #tpu.memory_space<vmem>>, vector<1x144x320xbf16>
      %52 = vector.shape_cast %51 : vector<1x144x320xbf16> to vector<144x320xbf16>
      %cst_48 = arith.constant dense<0.000000e+00> : vector<16x320xf32>
      %53 = tpu.matmul %50, %52, %cst_48 {dimension_numbers = #tpu.dot_dimension_numbers<[1], [0], [0], [1], [0, 0, 1, 1], [], []>} : vector<16x144xbf16>, vector<144x320xbf16>, vector<16x320xf32> -> vector<16x320xf32>
      %54 = arith.addf %46, %53 : vector<16x320xf32>
      %c4_i32 = arith.constant 4 : i32
      %55 = arith.addi %arg15, %c4_i32 : i32
      %56 = arith.index_cast %55 : i32 to index
      %c0_49 = arith.constant 0 : index
      %c0_50 = arith.constant 0 : index
      %57 = vector.load %arg13[%56, %c0_49, %c0_50] : memref<24x16x144xbf16, #tpu.memory_space<vmem>>, vector<1x16x144xbf16>
      %58 = vector.shape_cast %57 : vector<1x16x144xbf16> to vector<16x144xbf16>
      %c4 = arith.constant 4 : index
      %c0_51 = arith.constant 0 : index
      %c0_52 = arith.constant 0 : index
      %59 = vector.load %arg4[%c4, %c0_51, %c0_52] : memref<5x144x320xbf16, #tpu.memory_space<vmem>>, vector<1x144x320xbf16>
      %60 = vector.shape_cast %59 : vector<1x144x320xbf16> to vector<144x320xbf16>
      %cst_53 = arith.constant dense<0.000000e+00> : vector<16x320xf32>
      %61 = tpu.matmul %58, %60, %cst_53 {dimension_numbers = #tpu.dot_dimension_numbers<[1], [0], [0], [1], [0, 0, 1, 1], [], []>} : vector<16x144xbf16>, vector<144x320xbf16>, vector<16x320xf32> -> vector<16x320xf32>
      %62 = arith.addf %54, %61 : vector<16x320xf32>
      %63 = vector.broadcast %1 : vector<1x320xf32> to vector<16x320xf32>
      %64 = arith.addf %62, %63 : vector<16x320xf32>
      %cst_54 = arith.constant 0.000000e+00 : f32
      %65 = vector.broadcast %cst_54 : f32 to vector<16x320xf32>
      %66 = arith.maximumf %64, %65 : vector<16x320xf32>
      %67 = arith.truncf %66 : vector<16x320xf32> to vector<16x320xbf16>
      %c0_55 = arith.constant 0 : index
      %c0_56 = arith.constant 0 : index
      %68 = vector.load %arg14[%c0_55, %c0_56] : memref<16x120xf32, #tpu.memory_space<vmem>>, vector<16x120xf32>
      %69 = arith.index_cast %arg15 : i32 to index
      %c0_57 = arith.constant 0 : index
      %c0_58 = arith.constant 0 : index
      %70 = vector.load %arg6[%69, %c0_57, %c0_58] : memref<20x320x120xbf16, #tpu.memory_space<vmem>>, vector<1x320x120xbf16>
      %71 = vector.shape_cast %70 : vector<1x320x120xbf16> to vector<320x120xbf16>
      %cst_59 = arith.constant dense<0.000000e+00> : vector<16x120xf32>
      %72 = tpu.matmul %67, %71, %cst_59 {dimension_numbers = #tpu.dot_dimension_numbers<[1], [0], [0], [1], [0, 0, 1, 1], [], []>} : vector<16x320xbf16>, vector<320x120xbf16>, vector<16x120xf32> -> vector<16x120xf32>
      %73 = arith.addf %68, %72 : vector<16x120xf32>
      %c0_60 = arith.constant 0 : index
      %c0_61 = arith.constant 0 : index
      %74 = vector.load %arg14[%c0_60, %c0_61] : memref<16x120xf32, #tpu.memory_space<vmem>>, vector<16x120xf32>
      tpu.vector_store %arg14[%c0_60, %c0_61], %73 {strides = array<i32>} : memref<16x120xf32, #tpu.memory_space<vmem>>, vector<16x120xf32>,
    }
    %c20_i32_8 = arith.constant 20 : i32
    %c0_9 = arith.constant 0 : index
    %c0_10 = arith.constant 0 : index
    %6 = vector.load %arg14[%c0_9, %c0_10] : memref<16x120xf32, #tpu.memory_space<vmem>>, vector<16x120xf32>
    %c0_11 = arith.constant 0 : index
    %c0_12 = arith.constant 0 : index
    %7 = vector.load %arg7[%c0_11, %c0_12] : memref<1x120xf32, #tpu.memory_space<vmem>>, vector<1x120xf32>
    %8 = vector.broadcast %7 : vector<1x120xf32> to vector<16x120xf32>
    %9 = arith.addf %6, %8 : vector<16x120xf32>
    %cst_13 = arith.constant 0.000000e+00 : f32
    %10 = vector.broadcast %cst_13 : f32 to vector<16x120xf32>
    %11 = arith.maximumf %9, %10 : vector<16x120xf32>
    %c0_14 = arith.constant 0 : index
    %c0_15 = arith.constant 0 : index
    %12 = vector.load %arg8[%c0_14, %c0_15] : memref<120x84xf32, #tpu.memory_space<vmem>>, vector<120x84xf32>
    %cst_16 = arith.constant dense<0.000000e+00> : vector<16x84xf32>
    %13 = tpu.matmul %11, %12, %cst_16 {dimension_numbers = #tpu.dot_dimension_numbers<[1], [0], [0], [1], [0, 0, 1, 1], [], []>} : vector<16x120xf32>, vector<120x84xf32>, vector<16x84xf32> -> vector<16x84xf32>
    %c0_17 = arith.constant 0 : index
    %c0_18 = arith.constant 0 : index
    %14 = vector.load %arg9[%c0_17, %c0_18] : memref<1x84xf32, #tpu.memory_space<vmem>>, vector<1x84xf32>
    %15 = vector.broadcast %14 : vector<1x84xf32> to vector<16x84xf32>
    %16 = arith.addf %13, %15 : vector<16x84xf32>
    %cst_19 = arith.constant 0.000000e+00 : f32
    %17 = vector.broadcast %cst_19 : f32 to vector<16x84xf32>
    %18 = arith.maximumf %16, %17 : vector<16x84xf32>
    %c0_20 = arith.constant 0 : index
    %c0_21 = arith.constant 0 : index
    %19 = vector.load %arg10[%c0_20, %c0_21] : memref<84x10xf32, #tpu.memory_space<vmem>>, vector<84x10xf32>
    %cst_22 = arith.constant dense<0.000000e+00> : vector<16x10xf32>
    %20 = tpu.matmul %18, %19, %cst_22 {dimension_numbers = #tpu.dot_dimension_numbers<[1], [0], [0], [1], [0, 0, 1, 1], [], []>} : vector<16x84xf32>, vector<84x10xf32>, vector<16x10xf32> -> vector<16x10xf32>
    %c0_23 = arith.constant 0 : index
    %c0_24 = arith.constant 0 : index
    %21 = vector.load %arg11[%c0_23, %c0_24] : memref<1x10xf32, #tpu.memory_space<vmem>>, vector<1x10xf32>
    %22 = vector.broadcast %21 : vector<1x10xf32> to vector<16x10xf32>
    %23 = arith.addf %20, %22 : vector<16x10xf32>
    %c0_25 = arith.constant 0 : index
    %c0_26 = arith.constant 0 : index
    %24 = vector.load %arg12[%c0_25, %c0_26] : memref<16x10xf32, #tpu.memory_space<vmem>>, vector<16x10xf32>
    tpu.vector_store %arg12[%c0_25, %c0_26], %23 {strides = array<i32>} : memref<16x10xf32, #tpu.memory_space<vmem>>, vector<16x10xf32>,
    return
  }
  func.func @transform_0(%arg0: i32) -> (i32, i32, i32) {
    %c0_i32 = arith.constant 0 : i32
    %c0_i32_0 = arith.constant 0 : i32
    %c0_i32_1 = arith.constant 0 : i32
    return %c0_i32, %arg0, %c0_i32_0 : i32, i32, i32
  }
  func.func @transform_1(%arg0: i32) -> (i32, i32, i32) {
    %c0_i32 = arith.constant 0 : i32
    %c0_i32_0 = arith.constant 0 : i32
    %c0_i32_1 = arith.constant 0 : i32
    %c0_i32_2 = arith.constant 0 : i32
    return %c0_i32, %c0_i32_0, %c0_i32_1 : i32, i32, i32
  }
  func.func @transform_2(%arg0: i32) -> (i32, i32) {
    %c0_i32 = arith.constant 0 : i32
    %c0_i32_0 = arith.constant 0 : i32
    %c0_i32_1 = arith.constant 0 : i32
    return %c0_i32, %c0_i32_0 : i32, i32
  }
  func.func @transform_3(%arg0: i32) -> (i32, i32, i32) {
    %c0_i32 = arith.constant 0 : i32
    %c0_i32_0 = arith.constant 0 : i32
    %c0_i32_1 = arith.constant 0 : i32
    %c0_i32_2 = arith.constant 0 : i32
    return %c0_i32, %c0_i32_0, %c0_i32_1 : i32, i32, i32
  }
  func.func @transform_4(%arg0: i32) -> (i32, i32) {
    %c0_i32 = arith.constant 0 : i32
    %c0_i32_0 = arith.constant 0 : i32
    %c0_i32_1 = arith.constant 0 : i32
    return %c0_i32, %c0_i32_0 : i32, i32
  }
  func.func @transform_5(%arg0: i32) -> (i32, i32, i32) {
    %c0_i32 = arith.constant 0 : i32
    %c0_i32_0 = arith.constant 0 : i32
    %c0_i32_1 = arith.constant 0 : i32
    %c0_i32_2 = arith.constant 0 : i32
    return %c0_i32, %c0_i32_0, %c0_i32_1 : i32, i32, i32
  }
  func.func @transform_6(%arg0: i32) -> (i32, i32) {
    %c0_i32 = arith.constant 0 : i32
    %c0_i32_0 = arith.constant 0 : i32
    %c0_i32_1 = arith.constant 0 : i32
    return %c0_i32, %c0_i32_0 : i32, i32
  }
  func.func @transform_7(%arg0: i32) -> (i32, i32) {
    %c0_i32 = arith.constant 0 : i32
    %c0_i32_0 = arith.constant 0 : i32
    %c0_i32_1 = arith.constant 0 : i32
    return %c0_i32, %c0_i32_0 : i32, i32
  }
  func.func @transform_8(%arg0: i32) -> (i32, i32) {
    %c0_i32 = arith.constant 0 : i32
    %c0_i32_0 = arith.constant 0 : i32
    %c0_i32_1 = arith.constant 0 : i32
    return %c0_i32, %c0_i32_0 : i32, i32
  }
  func.func @transform_9(%arg0: i32) -> (i32, i32) {
    %c0_i32 = arith.constant 0 : i32
    %c0_i32_0 = arith.constant 0 : i32
    %c0_i32_1 = arith.constant 0 : i32
    return %c0_i32, %c0_i32_0 : i32, i32
  }
  func.func @transform_10(%arg0: i32) -> (i32, i32) {
    %c0_i32 = arith.constant 0 : i32
    %c0_i32_0 = arith.constant 0 : i32
    %c0_i32_1 = arith.constant 0 : i32
    return %c0_i32, %c0_i32_0 : i32, i32
  }
  func.func @transform_11(%arg0: i32) -> (i32, i32) {
    %c0_i32 = arith.constant 0 : i32
    %c0_i32_0 = arith.constant 0 : i32
    return %arg0, %c0_i32 : i32, i32
  }
}

</mosaic_0001>

<llo_original>
// kernel: net_forward.1
$region0: #{net_forward.1}
  #allocation0 [shape = 'u32[]', space=smem, size = 0x4, offset = 0x4, fixed_abs, tag = 'smem constant byte address 0x4 - core index']
  #allocation1 [shape = 'u32[144,128]{1,0:T(1,128)}', space=vmem, size = 0x12000, scoped, tag = 'internal scratch']
  #allocation2 [shape = 'bf16[24,16,144]{2,1,0:T(8,128)(2,1)}', space=vmem, size = 0x30000, scoped, tag = 'scratch operand']
  #allocation3 [shape = 'f32[16,120]{1,0:T(8,128)}', space=vmem, size = 0x2000, scoped, tag = 'scratch operand']
  %s0 = inlined_call_operand.vmem [shape: bf16[28,16,28], index: 0, kind: input, shape index: {}]
  %s1 = inlined_call_operand.hbm [shape: bf16[5,28,144], index: 1, kind: input, shape index: {}]
  %s2 = inlined_call_operand.hbm [shape: f32[1,144], index: 2, kind: input, shape index: {}]
  %s3 = inlined_call_operand.hbm [shape: bf16[5,144,320], index: 3, kind: input, shape index: {}]
  %s4 = inlined_call_operand.hbm [shape: f32[1,320], index: 4, kind: input, shape index: {}]
  %s5 = inlined_call_operand.hbm [shape: bf16[20,320,120], index: 5, kind: input, shape index: {}]
  %s6 = inlined_call_operand.hbm [shape: f32[1,120], index: 6, kind: input, shape index: {}]
  %s7 = inlined_call_operand.vmem [shape: f32[120,84], index: 7, kind: input, shape index: {}]
  %s8 = inlined_call_operand.hbm [shape: f32[1,84], index: 8, kind: input, shape index: {}]
  %s9 = inlined_call_operand.vmem [shape: f32[84,10], index: 9, kind: input, shape index: {}]
  %s10 = inlined_call_operand.hbm [shape: f32[1,10], index: 10, kind: input, shape index: {}]
  %s11 = inlined_call_operand.hbm [shape: f32[16,10], index: 11, kind: output, shape index: {}]
  %s12 = sld [smem:[#allocation0]]
  $region100: #{net_forward.1} parent=0
    _
  %s14 = ssub.s32 1, %s12
  %s15 = scalar_select 0, %s14, %s12
  $region1: #{net_forward.1} parent=0
    #allocation4 [shape = 'u8[81920]{0}', space=vmem, size = 0x14000, scoped, tag = 'input window, operand 1, single buffered']
    #allocation5 [shape = 's32[1]{0}', space=sflag, size = 0x4, scoped, tag = 'scoped memory for net_forward.1']
    #allocation6 [shape = 's32[1]{0}', space=sflag, size = 0x4, scoped, tag = 'scoped memory for net_forward.1']
    #allocation7 [shape = 'u8[1024]{0}', space=vmem, size = 0x400, scoped, tag = 'input window, operand 2, single buffered']
    #allocation8 [shape = 's32[1]{0}', space=sflag, size = 0x4, scoped, tag = 'scoped memory for net_forward.1']
    #allocation9 [shape = 'u8[552960]{0}', space=vmem, size = 0x87000, scoped, tag = 'input window, operand 3, single buffered']
    #allocation10 [shape = 'u8[1536]{0}', space=vmem, size = 0x800, scoped, tag = 'input window, operand 4, single buffered']
    #allocation11 [shape = 's32[1]{0}', space=sflag, size = 0x4, scoped, tag = 'scoped memory for net_forward.1']
    #allocation12 [shape = 'u8[1638400]{0}', space=vmem, size = 0x190000, scoped, tag = 'input window, operand 5, single buffered']
    #allocation13 [shape = 'u8[512]{0}', space=vmem, size = 0x400, scoped, tag = 'input window, operand 6, single buffered']
    #allocation14 [shape = 's32[1]{0}', space=sflag, size = 0x4, scoped, tag = 'scoped memory for net_forward.1']
    #allocation15 [shape = 'u8[512]{0}', space=vmem, size = 0x400, scoped, tag = 'input window, operand 8, single buffered']
    #allocation16 [shape = 'u8[512]{0}', space=vmem, size = 0x400, scoped, tag = 'input window, operand 10, single buffered']
    #allocation17 [shape = 's32[1]{0}', space=sflag, size = 0x4, scoped, tag = 'scoped memory for net_forward.1']
    #allocation18 [shape = 'u8[8192]{0}', space=vmem, size = 0x2000, scoped, tag = 'output window, operand 0, single buffered']
    %16 = vsyncpa [#allocation5], 0
    %17 = vsyncpa [#allocation8], 0
    %18 = vsyncpa [#allocation11], 0
    %19 = vsyncpa [#allocation14], 0
    %20 = vsyncpa [#allocation17], 0
    %21 = vsyncpa [#allocation6], 0
    // Predicated region
    $region2: #{net_forward.1} parent=1 // pred_check
      _
    $region3: #{net_forward.1} parent=1 // pred_check_branch
      %23 = sbr.rel (0) target = $region5
    $region4: #{net_forward.1} parent=1 // pred_region
      _
    $region5: #{net_forward.1} parent=1 // pred_fallthru
      _
    // Predicated region
    $region6: #{net_forward.1} parent=1 // pred_check
      _
    $region7: #{net_forward.1} parent=1 // pred_check_branch
      %25 = sbr.rel (0) target = $region9
    $region8: #{net_forward.1} parent=1 // pred_region
      %s27 = ssub.s32 2560, 2560
      %28 = vsyncadd [#allocation5], %s27
      %s29 = sshll.u32 [#allocation4], 4
      %s30 = int_to_ptr.vmem [resolvable:$true] %s29
      %35 = dma.hbm_to_vmem [thread:$0]  %s1, 2560, %s30, [#allocation5], 128, 128, 8
    $region9: #{net_forward.1} parent=1 // pred_fallthru
      _
    // Predicated region
    $region10: #{net_forward.1} parent=1 // pred_check
      _
    $region11: #{net_forward.1} parent=1 // pred_check_branch
      %37 = sbr.rel (0) target = $region13
    $region12: #{net_forward.1} parent=1 // pred_region
      %s39 = ssub.s32 32, 32
      %40 = vsyncadd [#allocation8], %s39
      %s42 = sshll.u32 [#allocation7], 4
      %s43 = int_to_ptr.vmem [resolvable:$true] %s42
      %45 = dma.hbm_to_vmem [thread:$0]  %s2, 32, %s43, [#allocation8]
    $region13: #{net_forward.1} parent=1 // pred_fallthru
      _
    // Predicated region
    $region14: #{net_forward.1} parent=1 // pred_check
      _
    $region15: #{net_forward.1} parent=1 // pred_check_branch
      %47 = sbr.rel (0) target = $region17
    $region16: #{net_forward.1} parent=1 // pred_region
      %s49 = ssub.s32 17280, 17280
      %50 = vsyncadd [#allocation8], %s49
      %s51 = sshll.u32 [#allocation9], 4
      %s52 = int_to_ptr.vmem [resolvable:$true] %s51
      %57 = dma.hbm_to_vmem [thread:$0]  %s3, 17280, %s52, [#allocation8], 192, 192, 12
    $region17: #{net_forward.1} parent=1 // pred_fallthru
      _
    // Predicated region
    $region18: #{net_forward.1} parent=1 // pred_check
      _
    $region19: #{net_forward.1} parent=1 // pred_check_branch
      %59 = sbr.rel (0) target = $region21
    $region20: #{net_forward.1} parent=1 // pred_region
      %s61 = ssub.s32 48, 48
      %62 = vsyncadd [#allocation11], %s61
      %s64 = sshll.u32 [#allocation10], 4
      %s65 = int_to_ptr.vmem [resolvable:$true] %s64
      %67 = dma.hbm_to_vmem [thread:$0]  %s4, 48, %s65, [#allocation11]
    $region21: #{net_forward.1} parent=1 // pred_fallthru
      _
    // Predicated region
    $region22: #{net_forward.1} parent=1 // pred_check
      _
    $region23: #{net_forward.1} parent=1 // pred_check_branch
      %69 = sbr.rel (0) target = $region25
    $region24: #{net_forward.1} parent=1 // pred_region
      %s71 = ssub.s32 51200, 51200
      %72 = vsyncadd [#allocation11], %s71
      %s73 = sshll.u32 [#allocation12], 4
      %s74 = int_to_ptr.vmem [resolvable:$true] %s73
      %79 = dma.hbm_to_vmem [thread:$0]  %s5, 51200, %s74, [#allocation11], 64, 64, 4
    $region25: #{net_forward.1} parent=1 // pred_fallthru
      _
    // Predicated region
    $region26: #{net_forward.1} parent=1 // pred_check
      _
    $region27: #{net_forward.1} parent=1 // pred_check_branch
      %81 = sbr.rel (0) target = $region29
    $region28: #{net_forward.1} parent=1 // pred_region
      %s83 = ssub.s32 16, 16
      %84 = vsyncadd [#allocation14], %s83
      %s86 = sshll.u32 [#allocation13], 4
      %s87 = int_to_ptr.vmem [resolvable:$true] %s86
      %89 = dma.hbm_to_vmem [thread:$0]  %s6, 16, %s87, [#allocation14]
    $region29: #{net_forward.1} parent=1 // pred_fallthru
      _
    // Predicated region
    $region30: #{net_forward.1} parent=1 // pred_check
      _
    $region31: #{net_forward.1} parent=1 // pred_check_branch
      %91 = sbr.rel (0) target = $region33
    $region32: #{net_forward.1} parent=1 // pred_region
      _
    $region33: #{net_forward.1} parent=1 // pred_fallthru
      _
    // Predicated region
    $region34: #{net_forward.1} parent=1 // pred_check
      _
    $region35: #{net_forward.1} parent=1 // pred_check_branch
      %93 = sbr.rel (0) target = $region37
    $region36: #{net_forward.1} parent=1 // pred_region
      %s95 = ssub.s32 16, 16
      %96 = vsyncadd [#allocation14], %s95
      %s98 = sshll.u32 [#allocation15], 4
      %s99 = int_to_ptr.vmem [resolvable:$true] %s98
      %101 = dma.hbm_to_vmem [thread:$0]  %s8, 16, %s99, [#allocation14]
    $region37: #{net_forward.1} parent=1 // pred_fallthru
      _
    // Predicated region
    $region38: #{net_forward.1} parent=1 // pred_check
      _
    $region39: #{net_forward.1} parent=1 // pred_check_branch
      %103 = sbr.rel (0) target = $region41
    $region40: #{net_forward.1} parent=1 // pred_region
      _
    $region41: #{net_forward.1} parent=1 // pred_fallthru
      _
    // Predicated region
    $region42: #{net_forward.1} parent=1 // pred_check
      _
    $region43: #{net_forward.1} parent=1 // pred_check_branch
      %105 = sbr.rel (0) target = $region45
    $region44: #{net_forward.1} parent=1 // pred_region
      %s107 = ssub.s32 16, 16
      %108 = vsyncadd [#allocation17], %s107
      %s110 = sshll.u32 [#allocation16], 4
      %s111 = int_to_ptr.vmem [resolvable:$true] %s110
      %113 = dma.hbm_to_vmem [thread:$0]  %s10, 16, %s111, [#allocation17]
    $region45: #{net_forward.1} parent=1 // pred_fallthru
      _
    // Predicated region
    $region46: #{net_forward.1} parent=1 // pred_check
      _
    $region47: #{net_forward.1} parent=1 // pred_check_branch
      %115 = sbr.rel (0) target = $region49
    $region48: #{net_forward.1} parent=1 // pred_region
      %116 = dma.done [#allocation5], 2560
    $region49: #{net_forward.1} parent=1 // pred_fallthru
      _
    // Predicated region
    $region50: #{net_forward.1} parent=1 // pred_check
      _
    $region51: #{net_forward.1} parent=1 // pred_check_branch
      %118 = sbr.rel (0) target = $region53
    $region52: #{net_forward.1} parent=1 // pred_region
      %119 = dma.done [#allocation8], 32
    $region53: #{net_forward.1} parent=1 // pred_fallthru
      _
    // Predicated region
    $region54: #{net_forward.1} parent=1 // pred_check
      _
    $region55: #{net_forward.1} parent=1 // pred_check_branch
      %121 = sbr.rel (0) target = $region57
    $region56: #{net_forward.1} parent=1 // pred_region
      %122 = dma.done [#allocation8], 17280
    $region57: #{net_forward.1} parent=1 // pred_fallthru
      _
    // Predicated region
    $region58: #{net_forward.1} parent=1 // pred_check
      _
    $region59: #{net_forward.1} parent=1 // pred_check_branch
      %124 = sbr.rel (0) target = $region61
    $region60: #{net_forward.1} parent=1 // pred_region
      %125 = dma.done [#allocation11], 48
    $region61: #{net_forward.1} parent=1 // pred_fallthru
      _
    // Predicated region
    $region62: #{net_forward.1} parent=1 // pred_check
      _
    $region63: #{net_forward.1} parent=1 // pred_check_branch
      %127 = sbr.rel (0) target = $region65
    $region64: #{net_forward.1} parent=1 // pred_region
      %128 = dma.done [#allocation11], 51200
    $region65: #{net_forward.1} parent=1 // pred_fallthru
      _
    // Predicated region
    $region66: #{net_forward.1} parent=1 // pred_check
      _
    $region67: #{net_forward.1} parent=1 // pred_check_branch
      %130 = sbr.rel (0) target = $region69
    $region68: #{net_forward.1} parent=1 // pred_region
      %131 = dma.done [#allocation14], 16
    $region69: #{net_forward.1} parent=1 // pred_fallthru
      _
    // Predicated region
    $region70: #{net_forward.1} parent=1 // pred_check
      _
    $region71: #{net_forward.1} parent=1 // pred_check_branch
      %133 = sbr.rel (0) target = $region73
    $region72: #{net_forward.1} parent=1 // pred_region
      %134 = dma.done [#allocation14], 16
    $region73: #{net_forward.1} parent=1 // pred_fallthru
      _
    // Predicated region
    $region74: #{net_forward.1} parent=1 // pred_check
      _
    $region75: #{net_forward.1} parent=1 // pred_check_branch
      %136 = sbr.rel (0) target = $region77
    $region76: #{net_forward.1} parent=1 // pred_region
      %137 = dma.done [#allocation17], 16
    $region77: #{net_forward.1} parent=1 // pred_fallthru
      _
    %v139 = vld [vmem:[#allocation7] sm:$0x3]
    %v140 = vld [vmem:[#allocation10] sm:$0x7]
    loop: start=0, step=1, limit=24
    $region78: #{net_forward.1} parent=1 // loop_pre_header
      _
    $region79: #{net_forward.1} parent=1 // loop_header
      %s142 = sphi 0, %s146
      %p143 = scmp.ge.s32.totalorder %s142, 24
    $region80: #{net_forward.1} parent=1 // loop_header_branch
      %145 = sbr.rel (%p143) target = $region84
    $region81: #{net_forward.1} parent=1 // loop_body
      %s147 = smul.u32 %s142, 2
      %s148 = smul.addr %s147, 4
      %s149 = scalar_lea.vmem %s0, %s148
      %v150 = vld [vmem:[%s149] sm:$0xf]
      %v151 = vld [vmem:[%s149 + $0x4] sm:$0xf]
      %v152 = vld [vmem:[#allocation4] sm:$0xff]
      %v153 = vld [vmem:[#allocation4 + $0x8] sm:$0xff]
      %v154 = vld [vmem:[#allocation4 + $0x10] sm:$0xff]
      %v155 = vld [vmem:[#allocation4 + $0x18] sm:$0x33]
      %s156 = sadd.s32 %s142, 1
      %s157 = smul.u32 %s156, 2
      %s158 = smul.addr %s157, 4
      %s159 = scalar_lea.vmem %s0, %s158
      %v160 = vld [vmem:[%s159] sm:$0xf]
      %v161 = vld [vmem:[%s159 + $0x4] sm:$0xf]
      %s162 = scalar_lea.vmem [#allocation4], 32
      %v163 = vld [vmem:[%s162] sm:$0xff]
      %v164 = vld [vmem:[%s162 + $0x8] sm:$0xff]
      %v165 = vld [vmem:[%s162 + $0x10] sm:$0xff]
      %v166 = vld [vmem:[%s162 + $0x18] sm:$0x33]
      %v169 = vunpack.c.l.b16 %v160
      %v170 = vunpack.c.l.b16 %v161
      %v171 = vpack.c.b16 %v170, %v169
      %v176 = vunpack.c.l.b16 %v163
      %v177 = vunpack.c.h.b16 %v163
      %v178 = vunpack.c.l.b16 %v164
      %v179 = vunpack.c.h.b16 %v164
      %v180 = vunpack.c.l.b16 %v165
      %v181 = vunpack.c.h.b16 %v165
      %v182 = vunpack.c.l.b16 %v166
      %v183 = vunpack.c.h.b16 %v166
      %v184 = vpack.c.b16 %v178, %v176
      %v185 = vpack.c.b16 %v179, %v177
      %v186 = vpack.c.b16 %v182, %v180
      %v187 = vpack.c.b16 %v183, %v181
      %vm190 = vcmask 228352
      %v192 = vsel %vm190, %v171, 0
      %vm194 = vcmask 1045504
      %v196 = vsel %vm194, %v186, 0
      %v199 = vsel %vm194, %v187, 0
      %201 = vmatprep.subr.bf16.mxu0 0
      %202 = vmatpush1.bf16.msra.mxu0 0
      %203 = vmatprep.subr.bf16.mxu0 0
      %204 = vmatpush1.bf16.msra.mxu0 0
      %205 = vmatprep.subr.bf16.mxu0 0
      %206 = vmatpush1.bf16.msra.mxu0 0
      %207 = vmatprep.subr.bf16.mxu0 0
      %208 = vmatpush1.bf16.msra.mxu0 0
      %209 = vmatprep.subr.bf16.mxu0 0
      %210 = vmatpush1.bf16.msra.mxu0 0
      %211 = vmatprep.subr.bf16.mxu0 0
      %212 = vmatpush1.bf16.msra.mxu0 0
      %213 = vmatprep.subr.bf16.mxu0 %v199
      %214 = vmatpush1.bf16.msra.mxu0 %v196
      %215 = vmatprep.subr.bf16.mxu0 %v185
      %216 = vmatpush1.bf16.msra.mxu0 %v184
      %217 = vmatprep.subr.bf16.mxu0 0
      %218 = vmatpush2.bf16.msra.mxu0 0
      %219 = vmatprep.subr.bf16.mxu0 0
      %220 = vmatpush2.bf16.msra.mxu0 0
      %221 = vmatprep.subr.bf16.mxu0 0
      %222 = vmatpush2.bf16.msra.mxu0 0
      %223 = vmatprep.subr.bf16.mxu0 0
      %224 = vmatpush2.bf16.msra.mxu0 0
      %225 = vmatprep.subr.bf16.mxu0 0
      %226 = vmatpush2.bf16.msra.mxu0 0
      %227 = vmatprep.subr.bf16.mxu0 0
      %228 = vmatpush2.bf16.msra.mxu0 0
      %229 = vmatprep.subr.bf16.mxu0 0
      %230 = vmatpush2.bf16.msra.mxu0 0
      %231 = vmatprep.subr.bf16.mxu0 0
      %232 = vmatpush2.bf16.msra.mxu0 0
      %233 = vmatprep.mubr.bf16.mxu0 0
      %234 = vmatmul.mubr.bf16.gmra.mxu0 %v192
      %v235 = vpop.f32.mrf.mxu0
      %v236 = vadd.f32 0.0, %v235
      %v237 = vpop.f32.mrf.mxu0
      %v238 = vadd.f32 0.0, %v237
      %v239 = vpop.f32.mrf.mxu0
      %v240 = vadd.f32 0.0, %v239
      %v241 = vpop.f32.mrf.mxu0
      %v242 = vadd.f32 0.0, %v241
      %243 = vdwg.mxu0
      %v246 = vunpack.c.l.b16 %v150
      %v247 = vunpack.c.l.b16 %v151
      %v248 = vpack.c.b16 %v247, %v246
      %v253 = vunpack.c.l.b16 %v152
      %v254 = vunpack.c.h.b16 %v152
      %v255 = vunpack.c.l.b16 %v153
      %v256 = vunpack.c.h.b16 %v153
      %v257 = vunpack.c.l.b16 %v154
      %v258 = vunpack.c.h.b16 %v154
      %v259 = vunpack.c.l.b16 %v155
      %v260 = vunpack.c.h.b16 %v155
      %v261 = vpack.c.b16 %v255, %v253
      %v262 = vpack.c.b16 %v256, %v254
      %v263 = vpack.c.b16 %v259, %v257
      %v264 = vpack.c.b16 %v260, %v258
      %v268 = vsel %vm190, %v248, 0
      %v271 = vsel %vm194, %v263, 0
      %v274 = vsel %vm194, %v264, 0
      %276 = vmatprep.subr.bf16.mxu0 0
      %277 = vmatpush1.bf16.msra.mxu0 0
      %278 = vmatprep.subr.bf16.mxu0 0
      %279 = vmatpush1.bf16.msra.mxu0 0
      %280 = vmatprep.subr.bf16.mxu0 0
      %281 = vmatpush1.bf16.msra.mxu0 0
      %282 = vmatprep.subr.bf16.mxu0 0
      %283 = vmatpush1.bf16.msra.mxu0 0
      %284 = vmatprep.subr.bf16.mxu0 0
      %285 = vmatpush1.bf16.msra.mxu0 0
      %286 = vmatprep.subr.bf16.mxu0 0
      %287 = vmatpush1.bf16.msra.mxu0 0
      %288 = vmatprep.subr.bf16.mxu0 %v274
      %289 = vmatpush1.bf16.msra.mxu0 %v271
      %290 = vmatprep.subr.bf16.mxu0 %v262
      %291 = vmatpush1.bf16.msra.mxu0 %v261
      %292 = vmatprep.subr.bf16.mxu0 0
      %293 = vmatpush2.bf16.msra.mxu0 0
      %294 = vmatprep.subr.bf16.mxu0 0
      %295 = vmatpush2.bf16.msra.mxu0 0
      %296 = vmatprep.subr.bf16.mxu0 0
      %297 = vmatpush2.bf16.msra.mxu0 0
      %298 = vmatprep.subr.bf16.mxu0 0
      %299 = vmatpush2.bf16.msra.mxu0 0
      %300 = vmatprep.subr.bf16.mxu0 0
      %301 = vmatpush2.bf16.msra.mxu0 0
      %302 = vmatprep.subr.bf16.mxu0 0
      %303 = vmatpush2.bf16.msra.mxu0 0
      %304 = vmatprep.subr.bf16.mxu0 0
      %305 = vmatpush2.bf16.msra.mxu0 0
      %306 = vmatprep.subr.bf16.mxu0 0
      %307 = vmatpush2.bf16.msra.mxu0 0
      %308 = vmatprep.mubr.bf16.mxu0 0
      %309 = vmatmul.mubr.bf16.gmra.mxu0 %v268
      %v310 = vpop.f32.mrf.mxu0
      %v311 = vadd.f32 %v236, %v310
      %v312 = vpop.f32.mrf.mxu0
      %v313 = vadd.f32 %v238, %v312
      %v314 = vpop.f32.mrf.mxu0
      %v315 = vadd.f32 %v240, %v314
      %v316 = vpop.f32.mrf.mxu0
      %v317 = vadd.f32 %v242, %v316
      %318 = vdwg.mxu0
      %s319 = sadd.s32 %s142, 2
      %s320 = smul.u32 %s319, 2
      %s321 = smul.addr %s320, 4
      %s322 = scalar_lea.vmem %s0, %s321
      %v323 = vld [vmem:[%s322] sm:$0xf]
      %v324 = vld [vmem:[%s322 + $0x4] sm:$0xf]
      %s325 = scalar_lea.vmem [#allocation4], 64
      %v326 = vld [vmem:[%s325] sm:$0xff]
      %v327 = vld [vmem:[%s325 + $0x8] sm:$0xff]
      %v328 = vld [vmem:[%s325 + $0x10] sm:$0xff]
      %v329 = vld [vmem:[%s325 + $0x18] sm:$0x33]
      %v332 = vunpack.c.l.b16 %v323
      %v333 = vunpack.c.l.b16 %v324
      %v334 = vpack.c.b16 %v333, %v332
      %v339 = vunpack.c.l.b16 %v326
      %v340 = vunpack.c.h.b16 %v326
      %v341 = vunpack.c.l.b16 %v327
      %v342 = vunpack.c.h.b16 %v327
      %v343 = vunpack.c.l.b16 %v328
      %v344 = vunpack.c.h.b16 %v328
      %v345 = vunpack.c.l.b16 %v329
      %v346 = vunpack.c.h.b16 %v329
      %v347 = vpack.c.b16 %v341, %v339
      %v348 = vpack.c.b16 %v342, %v340
      %v349 = vpack.c.b16 %v345, %v343
      %v350 = vpack.c.b16 %v346, %v344
      %v354 = vsel %vm190, %v334, 0
      %v357 = vsel %vm194, %v349, 0
      %v360 = vsel %vm194, %v350, 0
      %362 = vmatprep.subr.bf16.mxu0 0
      %363 = vmatpush1.bf16.msra.mxu0 0
      %364 = vmatprep.subr.bf16.mxu0 0
      %365 = vmatpush1.bf16.msra.mxu0 0
      %366 = vmatprep.subr.bf16.mxu0 0
      %367 = vmatpush1.bf16.msra.mxu0 0
      %368 = vmatprep.subr.bf16.mxu0 0
      %369 = vmatpush1.bf16.msra.mxu0 0
      %370 = vmatprep.subr.bf16.mxu0 0
      %371 = vmatpush1.bf16.msra.mxu0 0
      %372 = vmatprep.subr.bf16.mxu0 0
      %373 = vmatpush1.bf16.msra.mxu0 0
      %374 = vmatprep.subr.bf16.mxu0 %v360
      %375 = vmatpush1.bf16.msra.mxu0 %v357
      %376 = vmatprep.subr.bf16.mxu0 %v348
      %377 = vmatpush1.bf16.msra.mxu0 %v347
      %378 = vmatprep.subr.bf16.mxu0 0
      %379 = vmatpush2.bf16.msra.mxu0 0
      %380 = vmatprep.subr.bf16.mxu0 0
      %381 = vmatpush2.bf16.msra.mxu0 0
      %382 = vmatprep.subr.bf16.mxu0 0
      %383 = vmatpush2.bf16.msra.mxu0 0
      %384 = vmatprep.subr.bf16.mxu0 0
      %385 = vmatpush2.bf16.msra.mxu0 0
      %386 = vmatprep.subr.bf16.mxu0 0
      %387 = vmatpush2.bf16.msra.mxu0 0
      %388 = vmatprep.subr.bf16.mxu0 0
      %389 = vmatpush2.bf16.msra.mxu0 0
      %390 = vmatprep.subr.bf16.mxu0 0
      %391 = vmatpush2.bf16.msra.mxu0 0
      %392 = vmatprep.subr.bf16.mxu0 0
      %393 = vmatpush2.bf16.msra.mxu0 0
      %394 = vmatprep.mubr.bf16.mxu0 0
      %395 = vmatmul.mubr.bf16.gmra.mxu0 %v354
      %v396 = vpop.f32.mrf.mxu0
      %v397 = vadd.f32 0.0, %v396
      %v398 = vpop.f32.mrf.mxu0
      %v399 = vadd.f32 0.0, %v398
      %v400 = vpop.f32.mrf.mxu0
      %v401 = vadd.f32 0.0, %v400
      %v402 = vpop.f32.mrf.mxu0
      %v403 = vadd.f32 0.0, %v402
      %404 = vdwg.mxu0
      %v405 = vadd.f32 %v311, %v397
      %v406 = vadd.f32 %v313, %v399
      %v407 = vadd.f32 %v315, %v401
      %v408 = vadd.f32 %v317, %v403
      %s409 = sadd.s32 %s142, 3
      %s410 = smul.u32 %s409, 2
      %s411 = smul.addr %s410, 4
      %s412 = scalar_lea.vmem %s0, %s411
      %v413 = vld [vmem:[%s412] sm:$0xf]
      %v414 = vld [vmem:[%s412 + $0x4] sm:$0xf]
      %s415 = scalar_lea.vmem [#allocation4], 96
      %v416 = vld [vmem:[%s415] sm:$0xff]
      %v417 = vld [vmem:[%s415 + $0x8] sm:$0xff]
      %v418 = vld [vmem:[%s415 + $0x10] sm:$0xff]
      %v419 = vld [vmem:[%s415 + $0x18] sm:$0x33]
      %v422 = vunpack.c.l.b16 %v413
      %v423 = vunpack.c.l.b16 %v414
      %v424 = vpack.c.b16 %v423, %v422
      %v429 = vunpack.c.l.b16 %v416
      %v430 = vunpack.c.h.b16 %v416
      %v431 = vunpack.c.l.b16 %v417
      %v432 = vunpack.c.h.b16 %v417
      %v433 = vunpack.c.l.b16 %v418
      %v434 = vunpack.c.h.b16 %v418
      %v435 = vunpack.c.l.b16 %v419
      %v436 = vunpack.c.h.b16 %v419
      %v437 = vpack.c.b16 %v431, %v429
      %v438 = vpack.c.b16 %v432, %v430
      %v439 = vpack.c.b16 %v435, %v433
      %v440 = vpack.c.b16 %v436, %v434
      %v444 = vsel %vm190, %v424, 0
      %v447 = vsel %vm194, %v439, 0
      %v450 = vsel %vm194, %v440, 0
      %452 = vmatprep.subr.bf16.mxu0 0
      %453 = vmatpush1.bf16.msra.mxu0 0
      %454 = vmatprep.subr.bf16.mxu0 0
      %455 = vmatpush1.bf16.msra.mxu0 0
      %456 = vmatprep.subr.bf16.mxu0 0
      %457 = vmatpush1.bf16.msra.mxu0 0
      %458 = vmatprep.subr.bf16.mxu0 0
      %459 = vmatpush1.bf16.msra.mxu0 0
      %460 = vmatprep.subr.bf16.mxu0 0
      %461 = vmatpush1.bf16.msra.mxu0 0
      %462 = vmatprep.subr.bf16.mxu0 0
      %463 = vmatpush1.bf16.msra.mxu0 0
      %464 = vmatprep.subr.bf16.mxu0 %v450
      %465 = vmatpush1.bf16.msra.mxu0 %v447
      %466 = vmatprep.subr.bf16.mxu0 %v438
      %467 = vmatpush1.bf16.msra.mxu0 %v437
      %468 = vmatprep.subr.bf16.mxu0 0
      %469 = vmatpush2.bf16.msra.mxu0 0
      %470 = vmatprep.subr.bf16.mxu0 0
      %471 = vmatpush2.bf16.msra.mxu0 0
      %472 = vmatprep.subr.bf16.mxu0 0
      %473 = vmatpush2.bf16.msra.mxu0 0
      %474 = vmatprep.subr.bf16.mxu0 0
      %475 = vmatpush2.bf16.msra.mxu0 0
      %476 = vmatprep.subr.bf16.mxu0 0
      %477 = vmatpush2.bf16.msra.mxu0 0
      %478 = vmatprep.subr.bf16.mxu0 0
      %479 = vmatpush2.bf16.msra.mxu0 0
      %480 = vmatprep.subr.bf16.mxu0 0
      %481 = vmatpush2.bf16.msra.mxu0 0
      %482 = vmatprep.subr.bf16.mxu0 0
      %483 = vmatpush2.bf16.msra.mxu0 0
      %484 = vmatprep.mubr.bf16.mxu0 0
      %485 = vmatmul.mubr.bf16.gmra.mxu0 %v444
      %v486 = vpop.f32.mrf.mxu0
      %v487 = vadd.f32 0.0, %v486
      %v488 = vpop.f32.mrf.mxu0
      %v489 = vadd.f32 0.0, %v488
      %v490 = vpop.f32.mrf.mxu0
      %v491 = vadd.f32 0.0, %v490
      %v492 = vpop.f32.mrf.mxu0
      %v493 = vadd.f32 0.0, %v492
      %494 = vdwg.mxu0
      %v495 = vadd.f32 %v405, %v487
      %v496 = vadd.f32 %v406, %v489
      %v497 = vadd.f32 %v407, %v491
      %v498 = vadd.f32 %v408, %v493
      %s499 = sadd.s32 %s142, 4
      %s500 = smul.u32 %s499, 2
      %s501 = smul.addr %s500, 4
      %s502 = scalar_lea.vmem %s0, %s501
      %v503 = vld [vmem:[%s502] sm:$0xf]
      %v504 = vld [vmem:[%s502 + $0x4] sm:$0xf]
      %s505 = scalar_lea.vmem [#allocation4], 128
      %v506 = vld [vmem:[%s505] sm:$0xff]
      %v507 = vld [vmem:[%s505 + $0x8] sm:$0xff]
      %v508 = vld [vmem:[%s505 + $0x10] sm:$0xff]
      %v509 = vld [vmem:[%s505 + $0x18] sm:$0x33]
      %v512 = vunpack.c.l.b16 %v503
      %v513 = vunpack.c.l.b16 %v504
      %v514 = vpack.c.b16 %v513, %v512
      %v519 = vunpack.c.l.b16 %v506
      %v520 = vunpack.c.h.b16 %v506
      %v521 = vunpack.c.l.b16 %v507
      %v522 = vunpack.c.h.b16 %v507
      %v523 = vunpack.c.l.b16 %v508
      %v524 = vunpack.c.h.b16 %v508
      %v525 = vunpack.c.l.b16 %v509
      %v526 = vunpack.c.h.b16 %v509
      %v527 = vpack.c.b16 %v521, %v519
      %v528 = vpack.c.b16 %v522, %v520
      %v529 = vpack.c.b16 %v525, %v523
      %v530 = vpack.c.b16 %v526, %v524
      %v534 = vsel %vm190, %v514, 0
      %v537 = vsel %vm194, %v529, 0
      %v540 = vsel %vm194, %v530, 0
      %542 = vmatprep.subr.bf16.mxu0 0
      %543 = vmatpush1.bf16.msra.mxu0 0
      %544 = vmatprep.subr.bf16.mxu0 0
      %545 = vmatpush1.bf16.msra.mxu0 0
      %546 = vmatprep.subr.bf16.mxu0 0
      %547 = vmatpush1.bf16.msra.mxu0 0
      %548 = vmatprep.subr.bf16.mxu0 0
      %549 = vmatpush1.bf16.msra.mxu0 0
      %550 = vmatprep.subr.bf16.mxu0 0
      %551 = vmatpush1.bf16.msra.mxu0 0
      %552 = vmatprep.subr.bf16.mxu0 0
      %553 = vmatpush1.bf16.msra.mxu0 0
      %554 = vmatprep.subr.bf16.mxu0 %v540
      %555 = vmatpush1.bf16.msra.mxu0 %v537
      %556 = vmatprep.subr.bf16.mxu0 %v528
      %557 = vmatpush1.bf16.msra.mxu0 %v527
      %558 = vmatprep.subr.bf16.mxu0 0
      %559 = vmatpush2.bf16.msra.mxu0 0
      %560 = vmatprep.subr.bf16.mxu0 0
      %561 = vmatpush2.bf16.msra.mxu0 0
      %562 = vmatprep.subr.bf16.mxu0 0
      %563 = vmatpush2.bf16.msra.mxu0 0
      %564 = vmatprep.subr.bf16.mxu0 0
      %565 = vmatpush2.bf16.msra.mxu0 0
      %566 = vmatprep.subr.bf16.mxu0 0
      %567 = vmatpush2.bf16.msra.mxu0 0
      %568 = vmatprep.subr.bf16.mxu0 0
      %569 = vmatpush2.bf16.msra.mxu0 0
      %570 = vmatprep.subr.bf16.mxu0 0
      %571 = vmatpush2.bf16.msra.mxu0 0
      %572 = vmatprep.subr.bf16.mxu0 0
      %573 = vmatpush2.bf16.msra.mxu0 0
      %574 = vmatprep.mubr.bf16.mxu0 0
      %575 = vmatmul.mubr.bf16.gmra.mxu0 %v534
      %v576 = vpop.f32.mrf.mxu0
      %v577 = vadd.f32 0.0, %v576
      %v578 = vpop.f32.mrf.mxu0
      %v579 = vadd.f32 0.0, %v578
      %v580 = vpop.f32.mrf.mxu0
      %v581 = vadd.f32 0.0, %v580
      %v582 = vpop.f32.mrf.mxu0
      %v583 = vadd.f32 0.0, %v582
      %584 = vdwg.mxu0
      %v585 = vadd.f32 %v495, %v577
      %v586 = vadd.f32 %v496, %v579
      %v587 = vadd.f32 %v497, %v581
      %v588 = vadd.f32 %v498, %v583
      %v590 = vlaneseq
      %v591 = vshrl.u32 %v590, 7
      %v592 = vsub.s32 0, %v591
      %v593 = vrot.slane %v139, %v592
      %v594 = vlaneseq
      %v595 = vshrl.u32 %v594, 7
      %v596 = vsub.s32 1, %v595
      %v597 = vrot.slane %v139, %v596
      %v600 = vadd.f32 %v585, %v593
      %v601 = vadd.f32 %v586, %v597
      %v602 = vadd.f32 %v587, %v593
      %v603 = vadd.f32 %v588, %v597
      %v604 = vmax.f32 %v600, 0.0
      %v605 = vmax.f32 %v601, 0.0
      %v606 = vmax.f32 %v602, 0.0
      %v607 = vmax.f32 %v603, 0.0
      %v608 = vpack.c.bf16 %v606, %v604
      %v609 = vpack.c.bf16 %v607, %v605
      %v612 = vunpack.c.l.b16 %v608
      %v613 = vunpack.c.l.b16 %v609
      %v614 = vunpack.c.h.b16 %v608
      %v615 = vunpack.c.h.b16 %v609
      %v616 = vpack.c.b16 %v613, %v612
      %v617 = vpack.c.b16 %v615, %v614
      %s620 = smul.u32 %s142, 4
      %s621 = smul.addr %s620, 4
      %s622 = scalar_lea.vmem [#allocation2], %s621
      %vm623 = vcmask 1043456
      %vm624 = vcmask 130052
      %vm625 = vmor %vm624, %vm623
      %626 = vst.msk [vmem:[%s622] sm:$0xff] %vm625, %v616
      %627 = vst.msk [vmem:[%s622 + $0x8] sm:$0xff] %vm625, %v617
    $region82: #{net_forward.1} parent=1 // loop_footer
      %s146 = sadd.s32 1, %s142
    $region83: #{net_forward.1} parent=1 // loop_footer_branch
      %141 = sbr.rel target = $region79
    $region84: #{net_forward.1} parent=1 // loop_exit
      _
    %vm628 = vcmask 982016
    %629 = vst.msk [vmem:[#allocation3] sm:$0xff] %vm628, 0.0
    %630 = vst.msk [vmem:[#allocation3 + $0x8] sm:$0xff] %vm628, 0.0
    loop: start=0, step=1, limit=20
    $region85: #{net_forward.1} parent=1 // loop_pre_header
      _
    $region86: #{net_forward.1} parent=1 // loop_header
      %s632 = sphi 0, %s636
      %p633 = scmp.ge.s32.totalorder %s632, 20
    $region87: #{net_forward.1} parent=1 // loop_header_branch
      %635 = sbr.rel (%p633) target = $region91
    $region88: #{net_forward.1} parent=1 // loop_body
      %s637 = smul.u32 %s632, 4
      %s638 = smul.addr %s637, 4
      %s639 = scalar_lea.vmem [#allocation2], %s638
      %v640 = vld [vmem:[%s639] sm:$0xff]
      %v641 = vld [vmem:[%s639 + $0x8] sm:$0xff]
      %v642 = vld [vmem:[#allocation9] sm:$0xff]
      %v643 = vld [vmem:[#allocation9 + $0x8] sm:$0xf]
      %v644 = vld [vmem:[#allocation9 + $0xc] sm:$0xff]
      %v645 = vld [vmem:[#allocation9 + $0x14] sm:$0xf]
      %v646 = vld [vmem:[#allocation9 + $0x18] sm:$0xff]
      %v647 = vld [vmem:[#allocation9 + $0x20] sm:$0xf]
      %v648 = vld [vmem:[#allocation9 + $0x24] sm:$0xff]
      %v649 = vld [vmem:[#allocation9 + $0x2c] sm:$0xf]
      %v650 = vld [vmem:[#allocation9 + $0x30] sm:$0xff]
      %v651 = vld [vmem:[#allocation9 + $0x38] sm:$0xf]
      %v652 = vld [vmem:[#allocation9 + $0x3c] sm:$0xff]
      %v653 = vld [vmem:[#allocation9 + $0x44] sm:$0xf]
      %v654 = vld [vmem:[#allocation9 + $0x48] sm:$0xff]
      %v655 = vld [vmem:[#allocation9 + $0x50] sm:$0xf]
      %v656 = vld [vmem:[#allocation9 + $0x54] sm:$0xff]
      %v657 = vld [vmem:[#allocation9 + $0x5c] sm:$0xf]
      %v658 = vld [vmem:[#allocation9 + $0x60] sm:$0xff]
      %v659 = vld [vmem:[#allocation9 + $0x68] sm:$0xf]
      %v660 = vld [vmem:[#allocation9 + $0x6c] sm:$0xff]
      %v661 = vld [vmem:[#allocation9 + $0x74] sm:$0xf]
      %v662 = vld [vmem:[#allocation9 + $0x78] sm:$0xff]
      %v663 = vld [vmem:[#allocation9 + $0x80] sm:$0xf]
      %v664 = vld [vmem:[#allocation9 + $0x84] sm:$0xff]
      %v665 = vld [vmem:[#allocation9 + $0x8c] sm:$0xf]
      %v666 = vld [vmem:[#allocation9 + $0x90] sm:$0xff]
      %v667 = vld [vmem:[#allocation9 + $0x98] sm:$0xf]
      %v668 = vld [vmem:[#allocation9 + $0x9c] sm:$0xff]
      %v669 = vld [vmem:[#allocation9 + $0xa4] sm:$0xf]
      %v670 = vld [vmem:[#allocation9 + $0xa8] sm:$0xff]
      %v671 = vld [vmem:[#allocation9 + $0xb0] sm:$0xf]
      %v672 = vld [vmem:[#allocation9 + $0xb4] sm:$0xff]
      %v673 = vld [vmem:[#allocation9 + $0xbc] sm:$0xf]
      %v674 = vld [vmem:[#allocation9 + $0xc0] sm:$0xff]
      %v675 = vld [vmem:[#allocation9 + $0xc8] sm:$0xf]
      %v676 = vld [vmem:[#allocation9 + $0xcc] sm:$0xff]
      %v677 = vld [vmem:[#allocation9 + $0xd4] sm:$0xf]
      %s678 = sadd.s32 %s632, 1
      %s679 = smul.u32 %s678, 4
      %s680 = smul.addr %s679, 4
      %s681 = scalar_lea.vmem [#allocation2], %s680
      %v682 = vld [vmem:[%s681] sm:$0xff]
      %v683 = vld [vmem:[%s681 + $0x8] sm:$0xff]
      %s684 = scalar_lea.vmem [#allocation9], 216
      %v685 = vld [vmem:[%s684] sm:$0xff]
      %v686 = vld [vmem:[%s684 + $0x8] sm:$0xf]
      %v687 = vld [vmem:[%s684 + $0xc] sm:$0xff]
      %v688 = vld [vmem:[%s684 + $0x14] sm:$0xf]
      %v689 = vld [vmem:[%s684 + $0x18] sm:$0xff]
      %v690 = vld [vmem:[%s684 + $0x20] sm:$0xf]
      %v691 = vld [vmem:[%s684 + $0x24] sm:$0xff]
      %v692 = vld [vmem:[%s684 + $0x2c] sm:$0xf]
      %v693 = vld [vmem:[%s684 + $0x30] sm:$0xff]
      %v694 = vld [vmem:[%s684 + $0x38] sm:$0xf]
      %v695 = vld [vmem:[%s684 + $0x3c] sm:$0xff]
      %v696 = vld [vmem:[%s684 + $0x44] sm:$0xf]
      %v697 = vld [vmem:[%s684 + $0x48] sm:$0xff]
      %v698 = vld [vmem:[%s684 + $0x50] sm:$0xf]
      %v699 = vld [vmem:[%s684 + $0x54] sm:$0xff]
      %v700 = vld [vmem:[%s684 + $0x5c] sm:$0xf]
      %v701 = vld [vmem:[%s684 + $0x60] sm:$0xff]
      %v702 = vld [vmem:[%s684 + $0x68] sm:$0xf]
      %v703 = vld [vmem:[%s684 + $0x6c] sm:$0xff]
      %v704 = vld [vmem:[%s684 + $0x74] sm:$0xf]
      %v705 = vld [vmem:[%s684 + $0x78] sm:$0xff]
      %v706 = vld [vmem:[%s684 + $0x80] sm:$0xf]
      %v707 = vld [vmem:[%s684 + $0x84] sm:$0xff]
      %v708 = vld [vmem:[%s684 + $0x8c] sm:$0xf]
      %v709 = vld [vmem:[%s684 + $0x90] sm:$0xff]
      %v710 = vld [vmem:[%s684 + $0x98] sm:$0xf]
      %v711 = vld [vmem:[%s684 + $0x9c] sm:$0xff]
      %v712 = vld [vmem:[%s684 + $0xa4] sm:$0xf]
      %v713 = vld [vmem:[%s684 + $0xa8] sm:$0xff]
      %v714 = vld [vmem:[%s684 + $0xb0] sm:$0xf]
      %v715 = vld [vmem:[%s684 + $0xb4] sm:$0xff]
      %v716 = vld [vmem:[%s684 + $0xbc] sm:$0xf]
      %v717 = vld [vmem:[%s684 + $0xc0] sm:$0xff]
      %v718 = vld [vmem:[%s684 + $0xc8] sm:$0xf]
      %v719 = vld [vmem:[%s684 + $0xcc] sm:$0xff]
      %v720 = vld [vmem:[%s684 + $0xd4] sm:$0xf]
      %v723 = vunpack.c.l.b16 %v682
      %v724 = vunpack.c.h.b16 %v682
      %v725 = vunpack.c.l.b16 %v683
      %v726 = vunpack.c.h.b16 %v683
      %v727 = vpack.c.b16 %v725, %v723
      %v728 = vpack.c.b16 %v726, %v724
      %v766 = vunpack.c.l.b16 %v685
      %v767 = vunpack.c.h.b16 %v685
      %v768 = vunpack.c.l.b16 %v686
      %v769 = vunpack.c.l.b16 %v687
      %v770 = vunpack.c.h.b16 %v687
      %v771 = vunpack.c.l.b16 %v688
      %v772 = vunpack.c.l.b16 %v689
      %v773 = vunpack.c.h.b16 %v689
      %v774 = vunpack.c.l.b16 %v690
      %v775 = vunpack.c.l.b16 %v691
      %v776 = vunpack.c.h.b16 %v691
      %v777 = vunpack.c.l.b16 %v692
      %v778 = vunpack.c.l.b16 %v693
      %v779 = vunpack.c.h.b16 %v693
      %v780 = vunpack.c.l.b16 %v694
      %v781 = vunpack.c.l.b16 %v695
      %v782 = vunpack.c.h.b16 %v695
      %v783 = vunpack.c.l.b16 %v696
      %v784 = vunpack.c.l.b16 %v697
      %v785 = vunpack.c.h.b16 %v697
      %v786 = vunpack.c.l.b16 %v698
      %v787 = vunpack.c.l.b16 %v699
      %v788 = vunpack.c.h.b16 %v699
      %v789 = vunpack.c.l.b16 %v700
      %v790 = vunpack.c.l.b16 %v701
      %v791 = vunpack.c.h.b16 %v701
      %v792 = vunpack.c.l.b16 %v702
      %v793 = vunpack.c.l.b16 %v703
      %v794 = vunpack.c.h.b16 %v703
      %v795 = vunpack.c.l.b16 %v704
      %v796 = vunpack.c.l.b16 %v705
      %v797 = vunpack.c.h.b16 %v705
      %v798 = vunpack.c.l.b16 %v706
      %v799 = vunpack.c.l.b16 %v707
      %v800 = vunpack.c.h.b16 %v707
      %v801 = vunpack.c.l.b16 %v708
      %v802 = vunpack.c.l.b16 %v709
      %v803 = vunpack.c.h.b16 %v709
      %v804 = vunpack.c.l.b16 %v710
      %v805 = vunpack.c.l.b16 %v711
      %v806 = vunpack.c.h.b16 %v711
      %v807 = vunpack.c.l.b16 %v712
      %v808 = vunpack.c.l.b16 %v713
      %v809 = vunpack.c.h.b16 %v713
      %v810 = vunpack.c.l.b16 %v714
      %v811 = vunpack.c.l.b16 %v715
      %v812 = vunpack.c.h.b16 %v715
      %v813 = vunpack.c.l.b16 %v716
      %v814 = vunpack.c.l.b16 %v717
      %v815 = vunpack.c.h.b16 %v717
      %v816 = vunpack.c.l.b16 %v718
      %v817 = vunpack.c.l.b16 %v719
      %v818 = vunpack.c.h.b16 %v719
      %v819 = vunpack.c.l.b16 %v720
      %v820 = vpack.c.b16 %v769, %v766
      %v821 = vpack.c.b16 %v770, %v767
      %v822 = vpack.c.b16 %v771, %v768
      %v823 = vpack.c.b16 %v775, %v772
      %v824 = vpack.c.b16 %v776, %v773
      %v825 = vpack.c.b16 %v777, %v774
      %v826 = vpack.c.b16 %v781, %v778
      %v827 = vpack.c.b16 %v782, %v779
      %v828 = vpack.c.b16 %v783, %v780
      %v829 = vpack.c.b16 %v787, %v784
      %v830 = vpack.c.b16 %v788, %v785
      %v831 = vpack.c.b16 %v789, %v786
      %v832 = vpack.c.b16 %v793, %v790
      %v833 = vpack.c.b16 %v794, %v791
      %v834 = vpack.c.b16 %v795, %v792
      %v835 = vpack.c.b16 %v799, %v796
      %v836 = vpack.c.b16 %v800, %v797
      %v837 = vpack.c.b16 %v801, %v798
      %v838 = vpack.c.b16 %v805, %v802
      %v839 = vpack.c.b16 %v806, %v803
      %v840 = vpack.c.b16 %v807, %v804
      %v841 = vpack.c.b16 %v811, %v808
      %v842 = vpack.c.b16 %v812, %v809
      %v843 = vpack.c.b16 %v813, %v810
      %v844 = vpack.c.b16 %v817, %v814
      %v845 = vpack.c.b16 %v818, %v815
      %v846 = vpack.c.b16 %v819, %v816
      %vm874 = vcmask 130048
      %v876 = vsel %vm874, %v728, 0
      %878 = vmatprep.subr.bf16.mxu0 %v842
      %879 = vmatpush1.bf16.msra.mxu0 %v841
      %880 = vmatprep.subr.bf16.mxu0 %v839
      %881 = vmatpush1.bf16.msra.mxu0 %v838
      %882 = vmatprep.subr.bf16.mxu0 %v836
      %883 = vmatpush1.bf16.msra.mxu0 %v835
      %884 = vmatprep.subr.bf16.mxu0 %v833
      %885 = vmatpush1.bf16.msra.mxu0 %v832
      %886 = vmatprep.subr.bf16.mxu0 %v830
      %887 = vmatpush1.bf16.msra.mxu0 %v829
      %888 = vmatprep.subr.bf16.mxu0 %v827
      %889 = vmatpush1.bf16.msra.mxu0 %v826
      %890 = vmatprep.subr.bf16.mxu0 %v824
      %891 = vmatpush1.bf16.msra.mxu0 %v823
      %892 = vmatprep.subr.bf16.mxu0 %v821
      %893 = vmatpush1.bf16.msra.mxu0 %v820
      %894 = vmatprep.subr.bf16.mxu0 0
      %895 = vmatpush2.bf16.msra.mxu0 0
      %896 = vmatprep.subr.bf16.mxu0 0
      %897 = vmatpush2.bf16.msra.mxu0 0
      %898 = vmatprep.subr.bf16.mxu0 0
      %899 = vmatpush2.bf16.msra.mxu0 0
      %900 = vmatprep.subr.bf16.mxu0 0
      %901 = vmatpush2.bf16.msra.mxu0 0
      %902 = vmatprep.subr.bf16.mxu0 0
      %903 = vmatpush2.bf16.msra.mxu0 0
      %904 = vmatprep.subr.bf16.mxu0 0
      %905 = vmatpush2.bf16.msra.mxu0 0
      %906 = vmatprep.subr.bf16.mxu0 0
      %907 = vmatpush2.bf16.msra.mxu0 0
      %908 = vmatprep.subr.bf16.mxu0 %v845
      %909 = vmatpush2.bf16.msra.mxu0 %v844
      %910 = vmatprep.mubr.bf16.mxu0 %v876
      %911 = vmatmul.mubr.bf16.gmra.mxu0 %v727
      %v912 = vpop.f32.mrf.mxu0
      %v913 = vadd.f32 0.0, %v912
      %v914 = vpop.f32.mrf.mxu0
      %v915 = vadd.f32 0.0, %v914
      %v916 = vpop.f32.mrf.mxu0
      %v917 = vadd.f32 0.0, %v916
      %v918 = vpop.f32.mrf.mxu0
      %v919 = vadd.f32 0.0, %v918
      %920 = vdwg.mxu0
      %921 = vmatprep.subr.bf16.mxu0 0
      %922 = vmatpush1.bf16.msra.mxu0 %v843
      %923 = vmatprep.subr.bf16.mxu0 0
      %924 = vmatpush1.bf16.msra.mxu0 %v840
      %925 = vmatprep.subr.bf16.mxu0 0
      %926 = vmatpush1.bf16.msra.mxu0 %v837
      %927 = vmatprep.subr.bf16.mxu0 0
      %928 = vmatpush1.bf16.msra.mxu0 %v834
      %929 = vmatprep.subr.bf16.mxu0 0
      %930 = vmatpush1.bf16.msra.mxu0 %v831
      %931 = vmatprep.subr.bf16.mxu0 0
      %932 = vmatpush1.bf16.msra.mxu0 %v828
      %933 = vmatprep.subr.bf16.mxu0 0
      %934 = vmatpush1.bf16.msra.mxu0 %v825
      %935 = vmatprep.subr.bf16.mxu0 0
      %936 = vmatpush1.bf16.msra.mxu0 %v822
      %937 = vmatprep.subr.bf16.mxu0 0
      %938 = vmatpush2.bf16.msra.mxu0 0
      %939 = vmatprep.subr.bf16.mxu0 0
      %940 = vmatpush2.bf16.msra.mxu0 0
      %941 = vmatprep.subr.bf16.mxu0 0
      %942 = vmatpush2.bf16.msra.mxu0 0
      %943 = vmatprep.subr.bf16.mxu0 0
      %944 = vmatpush2.bf16.msra.mxu0 0
      %945 = vmatprep.subr.bf16.mxu0 0
      %946 = vmatpush2.bf16.msra.mxu0 0
      %947 = vmatprep.subr.bf16.mxu0 0
      %948 = vmatpush2.bf16.msra.mxu0 0
      %949 = vmatprep.subr.bf16.mxu0 0
      %950 = vmatpush2.bf16.msra.mxu0 0
      %951 = vmatprep.subr.bf16.mxu0 0
      %952 = vmatpush2.bf16.msra.mxu0 %v846
      %953 = vmatprep.mubr.bf16.mxu0 %v876
      %954 = vmatmul.mubr.bf16.gmra.mxu0 %v727
      %v955 = vpop.f32.mrf.mxu0
      %v956 = vadd.f32 0.0, %v955
      %v957 = vpop.f32.mrf.mxu0
      %v958 = vpop.f32.mrf.mxu0
      %v959 = vadd.f32 0.0, %v958
      %v960 = vpop.f32.mrf.mxu0
      %961 = vdwg.mxu0
      %v964 = vunpack.c.l.b16 %v640
      %v965 = vunpack.c.h.b16 %v640
      %v966 = vunpack.c.l.b16 %v641
      %v967 = vunpack.c.h.b16 %v641
      %v968 = vpack.c.b16 %v966, %v964
      %v969 = vpack.c.b16 %v967, %v965
      %v1007 = vunpack.c.l.b16 %v642
      %v1008 = vunpack.c.h.b16 %v642
      %v1009 = vunpack.c.l.b16 %v643
      %v1010 = vunpack.c.l.b16 %v644
      %v1011 = vunpack.c.h.b16 %v644
      %v1012 = vunpack.c.l.b16 %v645
      %v1013 = vunpack.c.l.b16 %v646
      %v1014 = vunpack.c.h.b16 %v646
      %v1015 = vunpack.c.l.b16 %v647
      %v1016 = vunpack.c.l.b16 %v648
      %v1017 = vunpack.c.h.b16 %v648
      %v1018 = vunpack.c.l.b16 %v649
      %v1019 = vunpack.c.l.b16 %v650
      %v1020 = vunpack.c.h.b16 %v650
      %v1021 = vunpack.c.l.b16 %v651
      %v1022 = vunpack.c.l.b16 %v652
      %v1023 = vunpack.c.h.b16 %v652
      %v1024 = vunpack.c.l.b16 %v653
      %v1025 = vunpack.c.l.b16 %v654
      %v1026 = vunpack.c.h.b16 %v654
      %v1027 = vunpack.c.l.b16 %v655
      %v1028 = vunpack.c.l.b16 %v656
      %v1029 = vunpack.c.h.b16 %v656
      %v1030 = vunpack.c.l.b16 %v657
      %v1031 = vunpack.c.l.b16 %v658
      %v1032 = vunpack.c.h.b16 %v658
      %v1033 = vunpack.c.l.b16 %v659
      %v1034 = vunpack.c.l.b16 %v660
      %v1035 = vunpack.c.h.b16 %v660
      %v1036 = vunpack.c.l.b16 %v661
      %v1037 = vunpack.c.l.b16 %v662
      %v1038 = vunpack.c.h.b16 %v662
      %v1039 = vunpack.c.l.b16 %v663
      %v1040 = vunpack.c.l.b16 %v664
      %v1041 = vunpack.c.h.b16 %v664
      %v1042 = vunpack.c.l.b16 %v665
      %v1043 = vunpack.c.l.b16 %v666
      %v1044 = vunpack.c.h.b16 %v666
      %v1045 = vunpack.c.l.b16 %v667
      %v1046 = vunpack.c.l.b16 %v668
      %v1047 = vunpack.c.h.b16 %v668
      %v1048 = vunpack.c.l.b16 %v669
      %v1049 = vunpack.c.l.b16 %v670
      %v1050 = vunpack.c.h.b16 %v670
      %v1051 = vunpack.c.l.b16 %v671
      %v1052 = vunpack.c.l.b16 %v672
      %v1053 = vunpack.c.h.b16 %v672
      %v1054 = vunpack.c.l.b16 %v673
      %v1055 = vunpack.c.l.b16 %v674
      %v1056 = vunpack.c.h.b16 %v674
      %v1057 = vunpack.c.l.b16 %v675
      %v1058 = vunpack.c.l.b16 %v676
      %v1059 = vunpack.c.h.b16 %v676
      %v1060 = vunpack.c.l.b16 %v677
      %v1061 = vpack.c.b16 %v1010, %v1007
      %v1062 = vpack.c.b16 %v1011, %v1008
      %v1063 = vpack.c.b16 %v1012, %v1009
      %v1064 = vpack.c.b16 %v1016, %v1013
      %v1065 = vpack.c.b16 %v1017, %v1014
      %v1066 = vpack.c.b16 %v1018, %v1015
      %v1067 = vpack.c.b16 %v1022, %v1019
      %v1068 = vpack.c.b16 %v1023, %v1020
      %v1069 = vpack.c.b16 %v1024, %v1021
      %v1070 = vpack.c.b16 %v1028, %v1025
      %v1071 = vpack.c.b16 %v1029, %v1026
      %v1072 = vpack.c.b16 %v1030, %v1027
      %v1073 = vpack.c.b16 %v1034, %v1031
      %v1074 = vpack.c.b16 %v1035, %v1032
      %v1075 = vpack.c.b16 %v1036, %v1033
      %v1076 = vpack.c.b16 %v1040, %v1037
      %v1077 = vpack.c.b16 %v1041, %v1038
      %v1078 = vpack.c.b16 %v1042, %v1039
      %v1079 = vpack.c.b16 %v1046, %v1043
      %v1080 = vpack.c.b16 %v1047, %v1044
      %v1081 = vpack.c.b16 %v1048, %v1045
      %v1082 = vpack.c.b16 %v1052, %v1049
      %v1083 = vpack.c.b16 %v1053, %v1050
      %v1084 = vpack.c.b16 %v1054, %v1051
      %v1085 = vpack.c.b16 %v1058, %v1055
      %v1086 = vpack.c.b16 %v1059, %v1056
      %v1087 = vpack.c.b16 %v1060, %v1057
      %v1116 = vsel %vm874, %v969, 0
      %1118 = vmatprep.subr.bf16.mxu0 %v1083
      %1119 = vmatpush1.bf16.msra.mxu0 %v1082
      %1120 = vmatprep.subr.bf16.mxu0 %v1080
      %1121 = vmatpush1.bf16.msra.mxu0 %v1079
      %1122 = vmatprep.subr.bf16.mxu0 %v1077
      %1123 = vmatpush1.bf16.msra.mxu0 %v1076
      %1124 = vmatprep.subr.bf16.mxu0 %v1074
      %1125 = vmatpush1.bf16.msra.mxu0 %v1073
      %1126 = vmatprep.subr.bf16.mxu0 %v1071
      %1127 = vmatpush1.bf16.msra.mxu0 %v1070
      %1128 = vmatprep.subr.bf16.mxu0 %v1068
      %1129 = vmatpush1.bf16.msra.mxu0 %v1067
      %1130 = vmatprep.subr.bf16.mxu0 %v1065
      %1131 = vmatpush1.bf16.msra.mxu0 %v1064
      %1132 = vmatprep.subr.bf16.mxu0 %v1062
      %1133 = vmatpush1.bf16.msra.mxu0 %v1061
      %1134 = vmatprep.subr.bf16.mxu0 0
      %1135 = vmatpush2.bf16.msra.mxu0 0
      %1136 = vmatprep.subr.bf16.mxu0 0
      %1137 = vmatpush2.bf16.msra.mxu0 0
      %1138 = vmatprep.subr.bf16.mxu0 0
      %1139 = vmatpush2.bf16.msra.mxu0 0
      %1140 = vmatprep.subr.bf16.mxu0 0
      %1141 = vmatpush2.bf16.msra.mxu0 0
      %1142 = vmatprep.subr.bf16.mxu0 0
      %1143 = vmatpush2.bf16.msra.mxu0 0
      %1144 = vmatprep.subr.bf16.mxu0 0
      %1145 = vmatpush2.bf16.msra.mxu0 0
      %1146 = vmatprep.subr.bf16.mxu0 0
      %1147 = vmatpush2.bf16.msra.mxu0 0
      %1148 = vmatprep.subr.bf16.mxu0 %v1086
      %1149 = vmatpush2.bf16.msra.mxu0 %v1085
      %1150 = vmatprep.mubr.bf16.mxu0 %v1116
      %1151 = vmatmul.mubr.bf16.gmra.mxu0 %v968
      %v1152 = vpop.f32.mrf.mxu0
      %v1153 = vadd.f32 %v913, %v1152
      %v1154 = vpop.f32.mrf.mxu0
      %v1155 = vadd.f32 %v915, %v1154
      %v1156 = vpop.f32.mrf.mxu0
      %v1157 = vadd.f32 %v917, %v1156
      %v1158 = vpop.f32.mrf.mxu0
      %v1159 = vadd.f32 %v919, %v1158
      %1160 = vdwg.mxu0
      %1161 = vmatprep.subr.bf16.mxu0 0
      %1162 = vmatpush1.bf16.msra.mxu0 %v1084
      %1163 = vmatprep.subr.bf16.mxu0 0
      %1164 = vmatpush1.bf16.msra.mxu0 %v1081
      %1165 = vmatprep.subr.bf16.mxu0 0
      %1166 = vmatpush1.bf16.msra.mxu0 %v1078
      %1167 = vmatprep.subr.bf16.mxu0 0
      %1168 = vmatpush1.bf16.msra.mxu0 %v1075
      %1169 = vmatprep.subr.bf16.mxu0 0
      %1170 = vmatpush1.bf16.msra.mxu0 %v1072
      %1171 = vmatprep.subr.bf16.mxu0 0
      %1172 = vmatpush1.bf16.msra.mxu0 %v1069
      %1173 = vmatprep.subr.bf16.mxu0 0
      %1174 = vmatpush1.bf16.msra.mxu0 %v1066
      %1175 = vmatprep.subr.bf16.mxu0 0
      %1176 = vmatpush1.bf16.msra.mxu0 %v1063
      %1177 = vmatprep.subr.bf16.mxu0 0
      %1178 = vmatpush2.bf16.msra.mxu0 0
      %1179 = vmatprep.subr.bf16.mxu0 0
      %1180 = vmatpush2.bf16.msra.mxu0 0
      %1181 = vmatprep.subr.bf16.mxu0 0
      %1182 = vmatpush2.bf16.msra.mxu0 0
      %1183 = vmatprep.subr.bf16.mxu0 0
      %1184 = vmatpush2.bf16.msra.mxu0 0
      %1185 = vmatprep.subr.bf16.mxu0 0
      %1186 = vmatpush2.bf16.msra.mxu0 0
      %1187 = vmatprep.subr.bf16.mxu0 0
      %1188 = vmatpush2.bf16.msra.mxu0 0
      %1189 = vmatprep.subr.bf16.mxu0 0
      %1190 = vmatpush2.bf16.msra.mxu0 0
      %1191 = vmatprep.subr.bf16.mxu0 0
      %1192 = vmatpush2.bf16.msra.mxu0 %v1087
      %1193 = vmatprep.mubr.bf16.mxu0 %v1116
      %1194 = vmatmul.mubr.bf16.gmra.mxu0 %v968
      %v1195 = vpop.f32.mrf.mxu0
      %v1196 = vadd.f32 %v956, %v1195
      %v1197 = vpop.f32.mrf.mxu0
      %v1198 = vpop.f32.mrf.mxu0
      %v1199 = vadd.f32 %v959, %v1198
      %v1200 = vpop.f32.mrf.mxu0
      %1201 = vdwg.mxu0
      %s1202 = sadd.s32 %s632, 2
      %s1203 = smul.u32 %s1202, 4
      %s1204 = smul.addr %s1203, 4
      %s1205 = scalar_lea.vmem [#allocation2], %s1204
      %v1206 = vld [vmem:[%s1205] sm:$0xff]
      %v1207 = vld [vmem:[%s1205 + $0x8] sm:$0xff]
      %s1208 = scalar_lea.vmem [#allocation9], 432
      %v1209 = vld [vmem:[%s1208] sm:$0xff]
      %v1210 = vld [vmem:[%s1208 + $0x8] sm:$0xf]
      %v1211 = vld [vmem:[%s1208 + $0xc] sm:$0xff]
      %v1212 = vld [vmem:[%s1208 + $0x14] sm:$0xf]
      %v1213 = vld [vmem:[%s1208 + $0x18] sm:$0xff]
      %v1214 = vld [vmem:[%s1208 + $0x20] sm:$0xf]
      %v1215 = vld [vmem:[%s1208 + $0x24] sm:$0xff]
      %v1216 = vld [vmem:[%s1208 + $0x2c] sm:$0xf]
      %v1217 = vld [vmem:[%s1208 + $0x30] sm:$0xff]
      %v1218 = vld [vmem:[%s1208 + $0x38] sm:$0xf]
      %v1219 = vld [vmem:[%s1208 + $0x3c] sm:$0xff]
      %v1220 = vld [vmem:[%s1208 + $0x44] sm:$0xf]
      %v1221 = vld [vmem:[%s1208 + $0x48] sm:$0xff]
      %v1222 = vld [vmem:[%s1208 + $0x50] sm:$0xf]
      %v1223 = vld [vmem:[%s1208 + $0x54] sm:$0xff]
      %v1224 = vld [vmem:[%s1208 + $0x5c] sm:$0xf]
      %v1225 = vld [vmem:[%s1208 + $0x60] sm:$0xff]
      %v1226 = vld [vmem:[%s1208 + $0x68] sm:$0xf]
      %v1227 = vld [vmem:[%s1208 + $0x6c] sm:$0xff]
      %v1228 = vld [vmem:[%s1208 + $0x74] sm:$0xf]
      %v1229 = vld [vmem:[%s1208 + $0x78] sm:$0xff]
      %v1230 = vld [vmem:[%s1208 + $0x80] sm:$0xf]
      %v1231 = vld [vmem:[%s1208 + $0x84] sm:$0xff]
      %v1232 = vld [vmem:[%s1208 + $0x8c] sm:$0xf]
      %v1233 = vld [vmem:[%s1208 + $0x90] sm:$0xff]
      %v1234 = vld [vmem:[%s1208 + $0x98] sm:$0xf]
      %v1235 = vld [vmem:[%s1208 + $0x9c] sm:$0xff]
      %v1236 = vld [vmem:[%s1208 + $0xa4] sm:$0xf]
      %v1237 = vld [vmem:[%s1208 + $0xa8] sm:$0xff]
      %v1238 = vld [vmem:[%s1208 + $0xb0] sm:$0xf]
      %v1239 = vld [vmem:[%s1208 + $0xb4] sm:$0xff]
      %v1240 = vld [vmem:[%s1208 + $0xbc] sm:$0xf]
      %v1241 = vld [vmem:[%s1208 + $0xc0] sm:$0xff]
      %v1242 = vld [vmem:[%s1208 + $0xc8] sm:$0xf]
      %v1243 = vld [vmem:[%s1208 + $0xcc] sm:$0xff]
      %v1244 = vld [vmem:[%s1208 + $0xd4] sm:$0xf]
      %v1247 = vunpack.c.l.b16 %v1206
      %v1248 = vunpack.c.h.b16 %v1206
      %v1249 = vunpack.c.l.b16 %v1207
      %v1250 = vunpack.c.h.b16 %v1207
      %v1251 = vpack.c.b16 %v1249, %v1247
      %v1252 = vpack.c.b16 %v1250, %v1248
      %v1290 = vunpack.c.l.b16 %v1209
      %v1291 = vunpack.c.h.b16 %v1209
      %v1292 = vunpack.c.l.b16 %v1210
      %v1293 = vunpack.c.l.b16 %v1211
      %v1294 = vunpack.c.h.b16 %v1211
      %v1295 = vunpack.c.l.b16 %v1212
      %v1296 = vunpack.c.l.b16 %v1213
      %v1297 = vunpack.c.h.b16 %v1213
      %v1298 = vunpack.c.l.b16 %v1214
      %v1299 = vunpack.c.l.b16 %v1215
      %v1300 = vunpack.c.h.b16 %v1215
      %v1301 = vunpack.c.l.b16 %v1216
      %v1302 = vunpack.c.l.b16 %v1217
      %v1303 = vunpack.c.h.b16 %v1217
      %v1304 = vunpack.c.l.b16 %v1218
      %v1305 = vunpack.c.l.b16 %v1219
      %v1306 = vunpack.c.h.b16 %v1219
      %v1307 = vunpack.c.l.b16 %v1220
      %v1308 = vunpack.c.l.b16 %v1221
      %v1309 = vunpack.c.h.b16 %v1221
      %v1310 = vunpack.c.l.b16 %v1222
      %v1311 = vunpack.c.l.b16 %v1223
      %v1312 = vunpack.c.h.b16 %v1223
      %v1313 = vunpack.c.l.b16 %v1224
      %v1314 = vunpack.c.l.b16 %v1225
      %v1315 = vunpack.c.h.b16 %v1225
      %v1316 = vunpack.c.l.b16 %v1226
      %v1317 = vunpack.c.l.b16 %v1227
      %v1318 = vunpack.c.h.b16 %v1227
      %v1319 = vunpack.c.l.b16 %v1228
      %v1320 = vunpack.c.l.b16 %v1229
      %v1321 = vunpack.c.h.b16 %v1229
      %v1322 = vunpack.c.l.b16 %v1230
      %v1323 = vunpack.c.l.b16 %v1231
      %v1324 = vunpack.c.h.b16 %v1231
      %v1325 = vunpack.c.l.b16 %v1232
      %v1326 = vunpack.c.l.b16 %v1233
      %v1327 = vunpack.c.h.b16 %v1233
      %v1328 = vunpack.c.l.b16 %v1234
      %v1329 = vunpack.c.l.b16 %v1235
      %v1330 = vunpack.c.h.b16 %v1235
      %v1331 = vunpack.c.l.b16 %v1236
      %v1332 = vunpack.c.l.b16 %v1237
      %v1333 = vunpack.c.h.b16 %v1237
      %v1334 = vunpack.c.l.b16 %v1238
      %v1335 = vunpack.c.l.b16 %v1239
      %v1336 = vunpack.c.h.b16 %v1239
      %v1337 = vunpack.c.l.b16 %v1240
      %v1338 = vunpack.c.l.b16 %v1241
      %v1339 = vunpack.c.h.b16 %v1241
      %v1340 = vunpack.c.l.b16 %v1242
      %v1341 = vunpack.c.l.b16 %v1243
      %v1342 = vunpack.c.h.b16 %v1243
      %v1343 = vunpack.c.l.b16 %v1244
      %v1344 = vpack.c.b16 %v1293, %v1290
      %v1345 = vpack.c.b16 %v1294, %v1291
      %v1346 = vpack.c.b16 %v1295, %v1292
      %v1347 = vpack.c.b16 %v1299, %v1296
      %v1348 = vpack.c.b16 %v1300, %v1297
      %v1349 = vpack.c.b16 %v1301, %v1298
      %v1350 = vpack.c.b16 %v1305, %v1302
      %v1351 = vpack.c.b16 %v1306, %v1303
      %v1352 = vpack.c.b16 %v1307, %v1304
      %v1353 = vpack.c.b16 %v1311, %v1308
      %v1354 = vpack.c.b16 %v1312, %v1309
      %v1355 = vpack.c.b16 %v1313, %v1310
      %v1356 = vpack.c.b16 %v1317, %v1314
      %v1357 = vpack.c.b16 %v1318, %v1315
      %v1358 = vpack.c.b16 %v1319, %v1316
      %v1359 = vpack.c.b16 %v1323, %v1320
      %v1360 = vpack.c.b16 %v1324, %v1321
      %v1361 = vpack.c.b16 %v1325, %v1322
      %v1362 = vpack.c.b16 %v1329, %v1326
      %v1363 = vpack.c.b16 %v1330, %v1327
      %v1364 = vpack.c.b16 %v1331, %v1328
      %v1365 = vpack.c.b16 %v1335, %v1332
      %v1366 = vpack.c.b16 %v1336, %v1333
      %v1367 = vpack.c.b16 %v1337, %v1334
      %v1368 = vpack.c.b16 %v1341, %v1338
      %v1369 = vpack.c.b16 %v1342, %v1339
      %v1370 = vpack.c.b16 %v1343, %v1340
      %v1399 = vsel %vm874, %v1252, 0
      %1401 = vmatprep.subr.bf16.mxu0 %v1366
      %1402 = vmatpush1.bf16.msra.mxu0 %v1365
      %1403 = vmatprep.subr.bf16.mxu0 %v1363
      %1404 = vmatpush1.bf16.msra.mxu0 %v1362
      %1405 = vmatprep.subr.bf16.mxu0 %v1360
      %1406 = vmatpush1.bf16.msra.mxu0 %v1359
      %1407 = vmatprep.subr.bf16.mxu0 %v1357
      %1408 = vmatpush1.bf16.msra.mxu0 %v1356
      %1409 = vmatprep.subr.bf16.mxu0 %v1354
      %1410 = vmatpush1.bf16.msra.mxu0 %v1353
      %1411 = vmatprep.subr.bf16.mxu0 %v1351
      %1412 = vmatpush1.bf16.msra.mxu0 %v1350
      %1413 = vmatprep.subr.bf16.mxu0 %v1348
      %1414 = vmatpush1.bf16.msra.mxu0 %v1347
      %1415 = vmatprep.subr.bf16.mxu0 %v1345
      %1416 = vmatpush1.bf16.msra.mxu0 %v1344
      %1417 = vmatprep.subr.bf16.mxu0 0
      %1418 = vmatpush2.bf16.msra.mxu0 0
      %1419 = vmatprep.subr.bf16.mxu0 0
      %1420 = vmatpush2.bf16.msra.mxu0 0
      %1421 = vmatprep.subr.bf16.mxu0 0
      %1422 = vmatpush2.bf16.msra.mxu0 0
      %1423 = vmatprep.subr.bf16.mxu0 0
      %1424 = vmatpush2.bf16.msra.mxu0 0
      %1425 = vmatprep.subr.bf16.mxu0 0
      %1426 = vmatpush2.bf16.msra.mxu0 0
      %1427 = vmatprep.subr.bf16.mxu0 0
      %1428 = vmatpush2.bf16.msra.mxu0 0
      %1429 = vmatprep.subr.bf16.mxu0 0
      %1430 = vmatpush2.bf16.msra.mxu0 0
      %1431 = vmatprep.subr.bf16.mxu0 %v1369
      %1432 = vmatpush2.bf16.msra.mxu0 %v1368
      %1433 = vmatprep.mubr.bf16.mxu0 %v1399
      %1434 = vmatmul.mubr.bf16.gmra.mxu0 %v1251
      %v1435 = vpop.f32.mrf.mxu0
      %v1436 = vadd.f32 0.0, %v1435
      %v1437 = vpop.f32.mrf.mxu0
      %v1438 = vadd.f32 0.0, %v1437
      %v1439 = vpop.f32.mrf.mxu0
      %v1440 = vadd.f32 0.0, %v1439
      %v1441 = vpop.f32.mrf.mxu0
      %v1442 = vadd.f32 0.0, %v1441
      %1443 = vdwg.mxu0
      %1444 = vmatprep.subr.bf16.mxu0 0
      %1445 = vmatpush1.bf16.msra.mxu0 %v1367
      %1446 = vmatprep.subr.bf16.mxu0 0
      %1447 = vmatpush1.bf16.msra.mxu0 %v1364
      %1448 = vmatprep.subr.bf16.mxu0 0
      %1449 = vmatpush1.bf16.msra.mxu0 %v1361
      %1450 = vmatprep.subr.bf16.mxu0 0
      %1451 = vmatpush1.bf16.msra.mxu0 %v1358
      %1452 = vmatprep.subr.bf16.mxu0 0
      %1453 = vmatpush1.bf16.msra.mxu0 %v1355
      %1454 = vmatprep.subr.bf16.mxu0 0
      %1455 = vmatpush1.bf16.msra.mxu0 %v1352
      %1456 = vmatprep.subr.bf16.mxu0 0
      %1457 = vmatpush1.bf16.msra.mxu0 %v1349
      %1458 = vmatprep.subr.bf16.mxu0 0
      %1459 = vmatpush1.bf16.msra.mxu0 %v1346
      %1460 = vmatprep.subr.bf16.mxu0 0
      %1461 = vmatpush2.bf16.msra.mxu0 0
      %1462 = vmatprep.subr.bf16.mxu0 0
      %1463 = vmatpush2.bf16.msra.mxu0 0
      %1464 = vmatprep.subr.bf16.mxu0 0
      %1465 = vmatpush2.bf16.msra.mxu0 0
      %1466 = vmatprep.subr.bf16.mxu0 0
      %1467 = vmatpush2.bf16.msra.mxu0 0
      %1468 = vmatprep.subr.bf16.mxu0 0
      %1469 = vmatpush2.bf16.msra.mxu0 0
      %1470 = vmatprep.subr.bf16.mxu0 0
      %1471 = vmatpush2.bf16.msra.mxu0 0
      %1472 = vmatprep.subr.bf16.mxu0 0
      %1473 = vmatpush2.bf16.msra.mxu0 0
      %1474 = vmatprep.subr.bf16.mxu0 0
      %1475 = vmatpush2.bf16.msra.mxu0 %v1370
      %1476 = vmatprep.mubr.bf16.mxu0 %v1399
      %1477 = vmatmul.mubr.bf16.gmra.mxu0 %v1251
      %v1478 = vpop.f32.mrf.mxu0
      %v1479 = vadd.f32 0.0, %v1478
      %v1480 = vpop.f32.mrf.mxu0
      %v1481 = vpop.f32.mrf.mxu0
      %v1482 = vadd.f32 0.0, %v1481
      %v1483 = vpop.f32.mrf.mxu0
      %1484 = vdwg.mxu0
      %v1485 = vadd.f32 %v1153, %v1436
      %v1486 = vadd.f32 %v1155, %v1438
      %v1487 = vadd.f32 %v1196, %v1479
      %v1488 = vadd.f32 %v1157, %v1440
      %v1489 = vadd.f32 %v1159, %v1442
      %v1490 = vadd.f32 %v1199, %v1482
      %s1491 = sadd.s32 %s632, 3
      %s1492 = smul.u32 %s1491, 4
      %s1493 = smul.addr %s1492, 4
      %s1494 = scalar_lea.vmem [#allocation2], %s1493
      %v1495 = vld [vmem:[%s1494] sm:$0xff]
      %v1496 = vld [vmem:[%s1494 + $0x8] sm:$0xff]
      %s1497 = scalar_lea.vmem [#allocation9], 648
      %v1498 = vld [vmem:[%s1497] sm:$0xff]
      %v1499 = vld [vmem:[%s1497 + $0x8] sm:$0xf]
      %v1500 = vld [vmem:[%s1497 + $0xc] sm:$0xff]
      %v1501 = vld [vmem:[%s1497 + $0x14] sm:$0xf]
      %v1502 = vld [vmem:[%s1497 + $0x18] sm:$0xff]
      %v1503 = vld [vmem:[%s1497 + $0x20] sm:$0xf]
      %v1504 = vld [vmem:[%s1497 + $0x24] sm:$0xff]
      %v1505 = vld [vmem:[%s1497 + $0x2c] sm:$0xf]
      %v1506 = vld [vmem:[%s1497 + $0x30] sm:$0xff]
      %v1507 = vld [vmem:[%s1497 + $0x38] sm:$0xf]
      %v1508 = vld [vmem:[%s1497 + $0x3c] sm:$0xff]
      %v1509 = vld [vmem:[%s1497 + $0x44] sm:$0xf]
      %v1510 = vld [vmem:[%s1497 + $0x48] sm:$0xff]
      %v1511 = vld [vmem:[%s1497 + $0x50] sm:$0xf]
      %v1512 = vld [vmem:[%s1497 + $0x54] sm:$0xff]
      %v1513 = vld [vmem:[%s1497 + $0x5c] sm:$0xf]
      %v1514 = vld [vmem:[%s1497 + $0x60] sm:$0xff]
      %v1515 = vld [vmem:[%s1497 + $0x68] sm:$0xf]
      %v1516 = vld [vmem:[%s1497 + $0x6c] sm:$0xff]
      %v1517 = vld [vmem:[%s1497 + $0x74] sm:$0xf]
      %v1518 = vld [vmem:[%s1497 + $0x78] sm:$0xff]
      %v1519 = vld [vmem:[%s1497 + $0x80] sm:$0xf]
      %v1520 = vld [vmem:[%s1497 + $0x84] sm:$0xff]
      %v1521 = vld [vmem:[%s1497 + $0x8c] sm:$0xf]
      %v1522 = vld [vmem:[%s1497 + $0x90] sm:$0xff]
      %v1523 = vld [vmem:[%s1497 + $0x98] sm:$0xf]
      %v1524 = vld [vmem:[%s1497 + $0x9c] sm:$0xff]
      %v1525 = vld [vmem:[%s1497 + $0xa4] sm:$0xf]
      %v1526 = vld [vmem:[%s1497 + $0xa8] sm:$0xff]
      %v1527 = vld [vmem:[%s1497 + $0xb0] sm:$0xf]
      %v1528 = vld [vmem:[%s1497 + $0xb4] sm:$0xff]
      %v1529 = vld [vmem:[%s1497 + $0xbc] sm:$0xf]
      %v1530 = vld [vmem:[%s1497 + $0xc0] sm:$0xff]
      %v1531 = vld [vmem:[%s1497 + $0xc8] sm:$0xf]
      %v1532 = vld [vmem:[%s1497 + $0xcc] sm:$0xff]
      %v1533 = vld [vmem:[%s1497 + $0xd4] sm:$0xf]
      %v1536 = vunpack.c.l.b16 %v1495
      %v1537 = vunpack.c.h.b16 %v1495
      %v1538 = vunpack.c.l.b16 %v1496
      %v1539 = vunpack.c.h.b16 %v1496
      %v1540 = vpack.c.b16 %v1538, %v1536
      %v1541 = vpack.c.b16 %v1539, %v1537
      %v1579 = vunpack.c.l.b16 %v1498
      %v1580 = vunpack.c.h.b16 %v1498
      %v1581 = vunpack.c.l.b16 %v1499
      %v1582 = vunpack.c.l.b16 %v1500
      %v1583 = vunpack.c.h.b16 %v1500
      %v1584 = vunpack.c.l.b16 %v1501
      %v1585 = vunpack.c.l.b16 %v1502
      %v1586 = vunpack.c.h.b16 %v1502
      %v1587 = vunpack.c.l.b16 %v1503
      %v1588 = vunpack.c.l.b16 %v1504
      %v1589 = vunpack.c.h.b16 %v1504
      %v1590 = vunpack.c.l.b16 %v1505
      %v1591 = vunpack.c.l.b16 %v1506
      %v1592 = vunpack.c.h.b16 %v1506
      %v1593 = vunpack.c.l.b16 %v1507
      %v1594 = vunpack.c.l.b16 %v1508
      %v1595 = vunpack.c.h.b16 %v1508
      %v1596 = vunpack.c.l.b16 %v1509
      %v1597 = vunpack.c.l.b16 %v1510
      %v1598 = vunpack.c.h.b16 %v1510
      %v1599 = vunpack.c.l.b16 %v1511
      %v1600 = vunpack.c.l.b16 %v1512
      %v1601 = vunpack.c.h.b16 %v1512
      %v1602 = vunpack.c.l.b16 %v1513
      %v1603 = vunpack.c.l.b16 %v1514
      %v1604 = vunpack.c.h.b16 %v1514
      %v1605 = vunpack.c.l.b16 %v1515
      %v1606 = vunpack.c.l.b16 %v1516
      %v1607 = vunpack.c.h.b16 %v1516
      %v1608 = vunpack.c.l.b16 %v1517
      %v1609 = vunpack.c.l.b16 %v1518
      %v1610 = vunpack.c.h.b16 %v1518
      %v1611 = vunpack.c.l.b16 %v1519
      %v1612 = vunpack.c.l.b16 %v1520
      %v1613 = vunpack.c.h.b16 %v1520
      %v1614 = vunpack.c.l.b16 %v1521
      %v1615 = vunpack.c.l.b16 %v1522
      %v1616 = vunpack.c.h.b16 %v1522
      %v1617 = vunpack.c.l.b16 %v1523
      %v1618 = vunpack.c.l.b16 %v1524
      %v1619 = vunpack.c.h.b16 %v1524
      %v1620 = vunpack.c.l.b16 %v1525
      %v1621 = vunpack.c.l.b16 %v1526
      %v1622 = vunpack.c.h.b16 %v1526
      %v1623 = vunpack.c.l.b16 %v1527
      %v1624 = vunpack.c.l.b16 %v1528
      %v1625 = vunpack.c.h.b16 %v1528
      %v1626 = vunpack.c.l.b16 %v1529
      %v1627 = vunpack.c.l.b16 %v1530
      %v1628 = vunpack.c.h.b16 %v1530
      %v1629 = vunpack.c.l.b16 %v1531
      %v1630 = vunpack.c.l.b16 %v1532
      %v1631 = vunpack.c.h.b16 %v1532
      %v1632 = vunpack.c.l.b16 %v1533
      %v1633 = vpack.c.b16 %v1582, %v1579
      %v1634 = vpack.c.b16 %v1583, %v1580
      %v1635 = vpack.c.b16 %v1584, %v1581
      %v1636 = vpack.c.b16 %v1588, %v1585
      %v1637 = vpack.c.b16 %v1589, %v1586
      %v1638 = vpack.c.b16 %v1590, %v1587
      %v1639 = vpack.c.b16 %v1594, %v1591
      %v1640 = vpack.c.b16 %v1595, %v1592
      %v1641 = vpack.c.b16 %v1596, %v1593
      %v1642 = vpack.c.b16 %v1600, %v1597
      %v1643 = vpack.c.b16 %v1601, %v1598
      %v1644 = vpack.c.b16 %v1602, %v1599
      %v1645 = vpack.c.b16 %v1606, %v1603
      %v1646 = vpack.c.b16 %v1607, %v1604
      %v1647 = vpack.c.b16 %v1608, %v1605
      %v1648 = vpack.c.b16 %v1612, %v1609
      %v1649 = vpack.c.b16 %v1613, %v1610
      %v1650 = vpack.c.b16 %v1614, %v1611
      %v1651 = vpack.c.b16 %v1618, %v1615
      %v1652 = vpack.c.b16 %v1619, %v1616
      %v1653 = vpack.c.b16 %v1620, %v1617
      %v1654 = vpack.c.b16 %v1624, %v1621
      %v1655 = vpack.c.b16 %v1625, %v1622
      %v1656 = vpack.c.b16 %v1626, %v1623
      %v1657 = vpack.c.b16 %v1630, %v1627
      %v1658 = vpack.c.b16 %v1631, %v1628
      %v1659 = vpack.c.b16 %v1632, %v1629
      %v1688 = vsel %vm874, %v1541, 0
      %1690 = vmatprep.subr.bf16.mxu0 %v1655
      %1691 = vmatpush1.bf16.msra.mxu0 %v1654
      %1692 = vmatprep.subr.bf16.mxu0 %v1652
      %1693 = vmatpush1.bf16.msra.mxu0 %v1651
      %1694 = vmatprep.subr.bf16.mxu0 %v1649
      %1695 = vmatpush1.bf16.msra.mxu0 %v1648
      %1696 = vmatprep.subr.bf16.mxu0 %v1646
      %1697 = vmatpush1.bf16.msra.mxu0 %v1645
      %1698 = vmatprep.subr.bf16.mxu0 %v1643
      %1699 = vmatpush1.bf16.msra.mxu0 %v1642
      %1700 = vmatprep.subr.bf16.mxu0 %v1640
      %1701 = vmatpush1.bf16.msra.mxu0 %v1639
      %1702 = vmatprep.subr.bf16.mxu0 %v1637
      %1703 = vmatpush1.bf16.msra.mxu0 %v1636
      %1704 = vmatprep.subr.bf16.mxu0 %v1634
      %1705 = vmatpush1.bf16.msra.mxu0 %v1633
      %1706 = vmatprep.subr.bf16.mxu0 0
      %1707 = vmatpush2.bf16.msra.mxu0 0
      %1708 = vmatprep.subr.bf16.mxu0 0
      %1709 = vmatpush2.bf16.msra.mxu0 0
      %1710 = vmatprep.subr.bf16.mxu0 0
      %1711 = vmatpush2.bf16.msra.mxu0 0
      %1712 = vmatprep.subr.bf16.mxu0 0
      %1713 = vmatpush2.bf16.msra.mxu0 0
      %1714 = vmatprep.subr.bf16.mxu0 0
      %1715 = vmatpush2.bf16.msra.mxu0 0
      %1716 = vmatprep.subr.bf16.mxu0 0
      %1717 = vmatpush2.bf16.msra.mxu0 0
      %1718 = vmatprep.subr.bf16.mxu0 0
      %1719 = vmatpush2.bf16.msra.mxu0 0
      %1720 = vmatprep.subr.bf16.mxu0 %v1658
      %1721 = vmatpush2.bf16.msra.mxu0 %v1657
      %1722 = vmatprep.mubr.bf16.mxu0 %v1688
      %1723 = vmatmul.mubr.bf16.gmra.mxu0 %v1540
      %v1724 = vpop.f32.mrf.mxu0
      %v1725 = vadd.f32 0.0, %v1724
      %v1726 = vpop.f32.mrf.mxu0
      %v1727 = vadd.f32 0.0, %v1726
      %v1728 = vpop.f32.mrf.mxu0
      %v1729 = vadd.f32 0.0, %v1728
      %v1730 = vpop.f32.mrf.mxu0
      %v1731 = vadd.f32 0.0, %v1730
      %1732 = vdwg.mxu0
      %1733 = vmatprep.subr.bf16.mxu0 0
      %1734 = vmatpush1.bf16.msra.mxu0 %v1656
      %1735 = vmatprep.subr.bf16.mxu0 0
      %1736 = vmatpush1.bf16.msra.mxu0 %v1653
      %1737 = vmatprep.subr.bf16.mxu0 0
      %1738 = vmatpush1.bf16.msra.mxu0 %v1650
      %1739 = vmatprep.subr.bf16.mxu0 0
      %1740 = vmatpush1.bf16.msra.mxu0 %v1647
      %1741 = vmatprep.subr.bf16.mxu0 0
      %1742 = vmatpush1.bf16.msra.mxu0 %v1644
      %1743 = vmatprep.subr.bf16.mxu0 0
      %1744 = vmatpush1.bf16.msra.mxu0 %v1641
      %1745 = vmatprep.subr.bf16.mxu0 0
      %1746 = vmatpush1.bf16.msra.mxu0 %v1638
      %1747 = vmatprep.subr.bf16.mxu0 0
      %1748 = vmatpush1.bf16.msra.mxu0 %v1635
      %1749 = vmatprep.subr.bf16.mxu0 0
      %1750 = vmatpush2.bf16.msra.mxu0 0
      %1751 = vmatprep.subr.bf16.mxu0 0
      %1752 = vmatpush2.bf16.msra.mxu0 0
      %1753 = vmatprep.subr.bf16.mxu0 0
      %1754 = vmatpush2.bf16.msra.mxu0 0
      %1755 = vmatprep.subr.bf16.mxu0 0
      %1756 = vmatpush2.bf16.msra.mxu0 0
      %1757 = vmatprep.subr.bf16.mxu0 0
      %1758 = vmatpush2.bf16.msra.mxu0 0
      %1759 = vmatprep.subr.bf16.mxu0 0
      %1760 = vmatpush2.bf16.msra.mxu0 0
      %1761 = vmatprep.subr.bf16.mxu0 0
      %1762 = vmatpush2.bf16.msra.mxu0 0
      %1763 = vmatprep.subr.bf16.mxu0 0
      %1764 = vmatpush2.bf16.msra.mxu0 %v1659
      %1765 = vmatprep.mubr.bf16.mxu0 %v1688
      %1766 = vmatmul.mubr.bf16.gmra.mxu0 %v1540
      %v1767 = vpop.f32.mrf.mxu0
      %v1768 = vadd.f32 0.0, %v1767
      %v1769 = vpop.f32.mrf.mxu0
      %v1770 = vpop.f32.mrf.mxu0
      %v1771 = vadd.f32 0.0, %v1770
      %v1772 = vpop.f32.mrf.mxu0
      %1773 = vdwg.mxu0
      %v1774 = vadd.f32 %v1485, %v1725
      %v1775 = vadd.f32 %v1486, %v1727
      %v1776 = vadd.f32 %v1487, %v1768
      %v1777 = vadd.f32 %v1488, %v1729
      %v1778 = vadd.f32 %v1489, %v1731
      %v1779 = vadd.f32 %v1490, %v1771
      %s1780 = sadd.s32 %s632, 4
      %s1781 = smul.u32 %s1780, 4
      %s1782 = smul.addr %s1781, 4
      %s1783 = scalar_lea.vmem [#allocation2], %s1782
      %v1784 = vld [vmem:[%s1783] sm:$0xff]
      %v1785 = vld [vmem:[%s1783 + $0x8] sm:$0xff]
      %s1786 = scalar_lea.vmem [#allocation9], 864
      %v1787 = vld [vmem:[%s1786] sm:$0xff]
      %v1788 = vld [vmem:[%s1786 + $0x8] sm:$0xf]
      %v1789 = vld [vmem:[%s1786 + $0xc] sm:$0xff]
      %v1790 = vld [vmem:[%s1786 + $0x14] sm:$0xf]
      %v1791 = vld [vmem:[%s1786 + $0x18] sm:$0xff]
      %v1792 = vld [vmem:[%s1786 + $0x20] sm:$0xf]
      %v1793 = vld [vmem:[%s1786 + $0x24] sm:$0xff]
      %v1794 = vld [vmem:[%s1786 + $0x2c] sm:$0xf]
      %v1795 = vld [vmem:[%s1786 + $0x30] sm:$0xff]
      %v1796 = vld [vmem:[%s1786 + $0x38] sm:$0xf]
      %v1797 = vld [vmem:[%s1786 + $0x3c] sm:$0xff]
      %v1798 = vld [vmem:[%s1786 + $0x44] sm:$0xf]
      %v1799 = vld [vmem:[%s1786 + $0x48] sm:$0xff]
      %v1800 = vld [vmem:[%s1786 + $0x50] sm:$0xf]
      %v1801 = vld [vmem:[%s1786 + $0x54] sm:$0xff]
      %v1802 = vld [vmem:[%s1786 + $0x5c] sm:$0xf]
      %v1803 = vld [vmem:[%s1786 + $0x60] sm:$0xff]
      %v1804 = vld [vmem:[%s1786 + $0x68] sm:$0xf]
      %v1805 = vld [vmem:[%s1786 + $0x6c] sm:$0xff]
      %v1806 = vld [vmem:[%s1786 + $0x74] sm:$0xf]
      %v1807 = vld [vmem:[%s1786 + $0x78] sm:$0xff]
      %v1808 = vld [vmem:[%s1786 + $0x80] sm:$0xf]
      %v1809 = vld [vmem:[%s1786 + $0x84] sm:$0xff]
      %v1810 = vld [vmem:[%s1786 + $0x8c] sm:$0xf]
      %v1811 = vld [vmem:[%s1786 + $0x90] sm:$0xff]
      %v1812 = vld [vmem:[%s1786 + $0x98] sm:$0xf]
      %v1813 = vld [vmem:[%s1786 + $0x9c] sm:$0xff]
      %v1814 = vld [vmem:[%s1786 + $0xa4] sm:$0xf]
      %v1815 = vld [vmem:[%s1786 + $0xa8] sm:$0xff]
      %v1816 = vld [vmem:[%s1786 + $0xb0] sm:$0xf]
      %v1817 = vld [vmem:[%s1786 + $0xb4] sm:$0xff]
      %v1818 = vld [vmem:[%s1786 + $0xbc] sm:$0xf]
      %v1819 = vld [vmem:[%s1786 + $0xc0] sm:$0xff]
      %v1820 = vld [vmem:[%s1786 + $0xc8] sm:$0xf]
      %v1821 = vld [vmem:[%s1786 + $0xcc] sm:$0xff]
      %v1822 = vld [vmem:[%s1786 + $0xd4] sm:$0xf]
      %v1825 = vunpack.c.l.b16 %v1784
      %v1826 = vunpack.c.h.b16 %v1784
      %v1827 = vunpack.c.l.b16 %v1785
      %v1828 = vunpack.c.h.b16 %v1785
      %v1829 = vpack.c.b16 %v1827, %v1825
      %v1830 = vpack.c.b16 %v1828, %v1826
      %v1868 = vunpack.c.l.b16 %v1787
      %v1869 = vunpack.c.h.b16 %v1787
      %v1870 = vunpack.c.l.b16 %v1788
      %v1871 = vunpack.c.l.b16 %v1789
      %v1872 = vunpack.c.h.b16 %v1789
      %v1873 = vunpack.c.l.b16 %v1790
      %v1874 = vunpack.c.l.b16 %v1791
      %v1875 = vunpack.c.h.b16 %v1791
      %v1876 = vunpack.c.l.b16 %v1792
      %v1877 = vunpack.c.l.b16 %v1793
      %v1878 = vunpack.c.h.b16 %v1793
      %v1879 = vunpack.c.l.b16 %v1794
      %v1880 = vunpack.c.l.b16 %v1795
      %v1881 = vunpack.c.h.b16 %v1795
      %v1882 = vunpack.c.l.b16 %v1796
      %v1883 = vunpack.c.l.b16 %v1797
      %v1884 = vunpack.c.h.b16 %v1797
      %v1885 = vunpack.c.l.b16 %v1798
      %v1886 = vunpack.c.l.b16 %v1799
      %v1887 = vunpack.c.h.b16 %v1799
      %v1888 = vunpack.c.l.b16 %v1800
      %v1889 = vunpack.c.l.b16 %v1801
      %v1890 = vunpack.c.h.b16 %v1801
      %v1891 = vunpack.c.l.b16 %v1802
      %v1892 = vunpack.c.l.b16 %v1803
      %v1893 = vunpack.c.h.b16 %v1803
      %v1894 = vunpack.c.l.b16 %v1804
      %v1895 = vunpack.c.l.b16 %v1805
      %v1896 = vunpack.c.h.b16 %v1805
      %v1897 = vunpack.c.l.b16 %v1806
      %v1898 = vunpack.c.l.b16 %v1807
      %v1899 = vunpack.c.h.b16 %v1807
      %v1900 = vunpack.c.l.b16 %v1808
      %v1901 = vunpack.c.l.b16 %v1809
      %v1902 = vunpack.c.h.b16 %v1809
      %v1903 = vunpack.c.l.b16 %v1810
      %v1904 = vunpack.c.l.b16 %v1811
      %v1905 = vunpack.c.h.b16 %v1811
      %v1906 = vunpack.c.l.b16 %v1812
      %v1907 = vunpack.c.l.b16 %v1813
      %v1908 = vunpack.c.h.b16 %v1813
      %v1909 = vunpack.c.l.b16 %v1814
      %v1910 = vunpack.c.l.b16 %v1815
      %v1911 = vunpack.c.h.b16 %v1815
      %v1912 = vunpack.c.l.b16 %v1816
      %v1913 = vunpack.c.l.b16 %v1817
      %v1914 = vunpack.c.h.b16 %v1817
      %v1915 = vunpack.c.l.b16 %v1818
      %v1916 = vunpack.c.l.b16 %v1819
      %v1917 = vunpack.c.h.b16 %v1819
      %v1918 = vunpack.c.l.b16 %v1820
      %v1919 = vunpack.c.l.b16 %v1821
      %v1920 = vunpack.c.h.b16 %v1821
      %v1921 = vunpack.c.l.b16 %v1822
      %v1922 = vpack.c.b16 %v1871, %v1868
      %v1923 = vpack.c.b16 %v1872, %v1869
      %v1924 = vpack.c.b16 %v1873, %v1870
      %v1925 = vpack.c.b16 %v1877, %v1874
      %v1926 = vpack.c.b16 %v1878, %v1875
      %v1927 = vpack.c.b16 %v1879, %v1876
      %v1928 = vpack.c.b16 %v1883, %v1880
      %v1929 = vpack.c.b16 %v1884, %v1881
      %v1930 = vpack.c.b16 %v1885, %v1882
      %v1931 = vpack.c.b16 %v1889, %v1886
      %v1932 = vpack.c.b16 %v1890, %v1887
      %v1933 = vpack.c.b16 %v1891, %v1888
      %v1934 = vpack.c.b16 %v1895, %v1892
      %v1935 = vpack.c.b16 %v1896, %v1893
      %v1936 = vpack.c.b16 %v1897, %v1894
      %v1937 = vpack.c.b16 %v1901, %v1898
      %v1938 = vpack.c.b16 %v1902, %v1899
      %v1939 = vpack.c.b16 %v1903, %v1900
      %v1940 = vpack.c.b16 %v1907, %v1904
      %v1941 = vpack.c.b16 %v1908, %v1905
      %v1942 = vpack.c.b16 %v1909, %v1906
      %v1943 = vpack.c.b16 %v1913, %v1910
      %v1944 = vpack.c.b16 %v1914, %v1911
      %v1945 = vpack.c.b16 %v1915, %v1912
      %v1946 = vpack.c.b16 %v1919, %v1916
      %v1947 = vpack.c.b16 %v1920, %v1917
      %v1948 = vpack.c.b16 %v1921, %v1918
      %v1977 = vsel %vm874, %v1830, 0
      %1979 = vmatprep.subr.bf16.mxu0 %v1944
      %1980 = vmatpush1.bf16.msra.mxu0 %v1943
      %1981 = vmatprep.subr.bf16.mxu0 %v1941
      %1982 = vmatpush1.bf16.msra.mxu0 %v1940
      %1983 = vmatprep.subr.bf16.mxu0 %v1938
      %1984 = vmatpush1.bf16.msra.mxu0 %v1937
      %1985 = vmatprep.subr.bf16.mxu0 %v1935
      %1986 = vmatpush1.bf16.msra.mxu0 %v1934
      %1987 = vmatprep.subr.bf16.mxu0 %v1932
      %1988 = vmatpush1.bf16.msra.mxu0 %v1931
      %1989 = vmatprep.subr.bf16.mxu0 %v1929
      %1990 = vmatpush1.bf16.msra.mxu0 %v1928
      %1991 = vmatprep.subr.bf16.mxu0 %v1926
      %1992 = vmatpush1.bf16.msra.mxu0 %v1925
      %1993 = vmatprep.subr.bf16.mxu0 %v1923
      %1994 = vmatpush1.bf16.msra.mxu0 %v1922
      %1995 = vmatprep.subr.bf16.mxu0 0
      %1996 = vmatpush2.bf16.msra.mxu0 0
      %1997 = vmatprep.subr.bf16.mxu0 0
      %1998 = vmatpush2.bf16.msra.mxu0 0
      %1999 = vmatprep.subr.bf16.mxu0 0
      %2000 = vmatpush2.bf16.msra.mxu0 0
      %2001 = vmatprep.subr.bf16.mxu0 0
      %2002 = vmatpush2.bf16.msra.mxu0 0
      %2003 = vmatprep.subr.bf16.mxu0 0
      %2004 = vmatpush2.bf16.msra.mxu0 0
      %2005 = vmatprep.subr.bf16.mxu0 0
      %2006 = vmatpush2.bf16.msra.mxu0 0
      %2007 = vmatprep.subr.bf16.mxu0 0
      %2008 = vmatpush2.bf16.msra.mxu0 0
      %2009 = vmatprep.subr.bf16.mxu0 %v1947
      %2010 = vmatpush2.bf16.msra.mxu0 %v1946
      %2011 = vmatprep.mubr.bf16.mxu0 %v1977
      %2012 = vmatmul.mubr.bf16.gmra.mxu0 %v1829
      %v2013 = vpop.f32.mrf.mxu0
      %v2014 = vadd.f32 0.0, %v2013
      %v2015 = vpop.f32.mrf.mxu0
      %v2016 = vadd.f32 0.0, %v2015
      %v2017 = vpop.f32.mrf.mxu0
      %v2018 = vadd.f32 0.0, %v2017
      %v2019 = vpop.f32.mrf.mxu0
      %v2020 = vadd.f32 0.0, %v2019
      %2021 = vdwg.mxu0
      %2022 = vmatprep.subr.bf16.mxu0 0
      %2023 = vmatpush1.bf16.msra.mxu0 %v1945
      %2024 = vmatprep.subr.bf16.mxu0 0
      %2025 = vmatpush1.bf16.msra.mxu0 %v1942
      %2026 = vmatprep.subr.bf16.mxu0 0
      %2027 = vmatpush1.bf16.msra.mxu0 %v1939
      %2028 = vmatprep.subr.bf16.mxu0 0
      %2029 = vmatpush1.bf16.msra.mxu0 %v1936
      %2030 = vmatprep.subr.bf16.mxu0 0
      %2031 = vmatpush1.bf16.msra.mxu0 %v1933
      %2032 = vmatprep.subr.bf16.mxu0 0
      %2033 = vmatpush1.bf16.msra.mxu0 %v1930
      %2034 = vmatprep.subr.bf16.mxu0 0
      %2035 = vmatpush1.bf16.msra.mxu0 %v1927
      %2036 = vmatprep.subr.bf16.mxu0 0
      %2037 = vmatpush1.bf16.msra.mxu0 %v1924
      %2038 = vmatprep.subr.bf16.mxu0 0
      %2039 = vmatpush2.bf16.msra.mxu0 0
      %2040 = vmatprep.subr.bf16.mxu0 0
      %2041 = vmatpush2.bf16.msra.mxu0 0
      %2042 = vmatprep.subr.bf16.mxu0 0
      %2043 = vmatpush2.bf16.msra.mxu0 0
      %2044 = vmatprep.subr.bf16.mxu0 0
      %2045 = vmatpush2.bf16.msra.mxu0 0
      %2046 = vmatprep.subr.bf16.mxu0 0
      %2047 = vmatpush2.bf16.msra.mxu0 0
      %2048 = vmatprep.subr.bf16.mxu0 0
      %2049 = vmatpush2.bf16.msra.mxu0 0
      %2050 = vmatprep.subr.bf16.mxu0 0
      %2051 = vmatpush2.bf16.msra.mxu0 0
      %2052 = vmatprep.subr.bf16.mxu0 0
      %2053 = vmatpush2.bf16.msra.mxu0 %v1948
      %2054 = vmatprep.mubr.bf16.mxu0 %v1977
      %2055 = vmatmul.mubr.bf16.gmra.mxu0 %v1829
      %v2056 = vpop.f32.mrf.mxu0
      %v2057 = vadd.f32 0.0, %v2056
      %v2058 = vpop.f32.mrf.mxu0
      %v2059 = vpop.f32.mrf.mxu0
      %v2060 = vadd.f32 0.0, %v2059
      %v2061 = vpop.f32.mrf.mxu0
      %2062 = vdwg.mxu0
      %v2063 = vadd.f32 %v1774, %v2014
      %v2064 = vadd.f32 %v1775, %v2016
      %v2065 = vadd.f32 %v1776, %v2057
      %v2066 = vadd.f32 %v1777, %v2018
      %v2067 = vadd.f32 %v1778, %v2020
      %v2068 = vadd.f32 %v1779, %v2060
      %v2070 = vlaneseq
      %v2071 = vshrl.u32 %v2070, 7
      %v2072 = vsub.s32 0, %v2071
      %v2073 = vrot.slane %v140, %v2072
      %v2074 = vlaneseq
      %v2075 = vshrl.u32 %v2074, 7
      %v2076 = vsub.s32 1, %v2075
      %v2077 = vrot.slane %v140, %v2076
      %v2078 = vlaneseq
      %v2079 = vshrl.u32 %v2078, 7
      %v2080 = vsub.s32 2, %v2079
      %v2081 = vrot.slane %v140, %v2080
      %v2085 = vadd.f32 %v2063, %v2073
      %v2086 = vadd.f32 %v2064, %v2077
      %v2087 = vadd.f32 %v2065, %v2081
      %v2088 = vadd.f32 %v2066, %v2073
      %v2089 = vadd.f32 %v2067, %v2077
      %v2090 = vadd.f32 %v2068, %v2081
      %v2091 = vmax.f32 %v2085, 0.0
      %v2092 = vmax.f32 %v2086, 0.0
      %v2093 = vmax.f32 %v2087, 0.0
      %v2094 = vmax.f32 %v2088, 0.0
      %v2095 = vmax.f32 %v2089, 0.0
      %v2096 = vmax.f32 %v2090, 0.0
      %v2097 = vpack.c.bf16 %v2094, %v2091
      %v2098 = vpack.c.bf16 %v2095, %v2092
      %v2099 = vpack.c.bf16 %v2096, %v2093
      %v2100 = vld [vmem:[#allocation3] sm:$0xff]
      %v2101 = vld [vmem:[#allocation3 + $0x8] sm:$0xff]
      %s2102 = smul.u32 %s632, 40
      %s2103 = smul.addr %s2102, 4
      %s2104 = scalar_lea.vmem [#allocation12], %s2103
      %v2105 = vld [vmem:[%s2104] sm:$0xf]
      %v2106 = vld [vmem:[%s2104 + $0x4] sm:$0xf]
      %v2107 = vld [vmem:[%s2104 + $0x8] sm:$0xf]
      %v2108 = vld [vmem:[%s2104 + $0xc] sm:$0xf]
      %v2109 = vld [vmem:[%s2104 + $0x10] sm:$0xf]
      %v2110 = vld [vmem:[%s2104 + $0x14] sm:$0xf]
      %v2111 = vld [vmem:[%s2104 + $0x18] sm:$0xf]
      %v2112 = vld [vmem:[%s2104 + $0x1c] sm:$0xf]
      %v2113 = vld [vmem:[%s2104 + $0x20] sm:$0xf]
      %v2114 = vld [vmem:[%s2104 + $0x24] sm:$0xf]
      %v2115 = vld [vmem:[%s2104 + $0x28] sm:$0xf]
      %v2116 = vld [vmem:[%s2104 + $0x2c] sm:$0xf]
      %v2117 = vld [vmem:[%s2104 + $0x30] sm:$0xf]
      %v2118 = vld [vmem:[%s2104 + $0x34] sm:$0xf]
      %v2119 = vld [vmem:[%s2104 + $0x38] sm:$0xf]
      %v2120 = vld [vmem:[%s2104 + $0x3c] sm:$0xf]
      %v2121 = vld [vmem:[%s2104 + $0x40] sm:$0xf]
      %v2122 = vld [vmem:[%s2104 + $0x44] sm:$0xf]
      %v2123 = vld [vmem:[%s2104 + $0x48] sm:$0xf]
      %v2124 = vld [vmem:[%s2104 + $0x4c] sm:$0xf]
      %v2125 = vld [vmem:[%s2104 + $0x50] sm:$0xf]
      %v2126 = vld [vmem:[%s2104 + $0x54] sm:$0xf]
      %v2127 = vld [vmem:[%s2104 + $0x58] sm:$0xf]
      %v2128 = vld [vmem:[%s2104 + $0x5c] sm:$0xf]
      %v2129 = vld [vmem:[%s2104 + $0x60] sm:$0xf]
      %v2130 = vld [vmem:[%s2104 + $0x64] sm:$0xf]
      %v2131 = vld [vmem:[%s2104 + $0x68] sm:$0xf]
      %v2132 = vld [vmem:[%s2104 + $0x6c] sm:$0xf]
      %v2133 = vld [vmem:[%s2104 + $0x70] sm:$0xf]
      %v2134 = vld [vmem:[%s2104 + $0x74] sm:$0xf]
      %v2135 = vld [vmem:[%s2104 + $0x78] sm:$0xf]
      %v2136 = vld [vmem:[%s2104 + $0x7c] sm:$0xf]
      %v2137 = vld [vmem:[%s2104 + $0x80] sm:$0xf]
      %v2138 = vld [vmem:[%s2104 + $0x84] sm:$0xf]
      %v2139 = vld [vmem:[%s2104 + $0x88] sm:$0xf]
      %v2140 = vld [vmem:[%s2104 + $0x8c] sm:$0xf]
      %v2141 = vld [vmem:[%s2104 + $0x90] sm:$0xf]
      %v2142 = vld [vmem:[%s2104 + $0x94] sm:$0xf]
      %v2143 = vld [vmem:[%s2104 + $0x98] sm:$0xf]
      %v2144 = vld [vmem:[%s2104 + $0x9c] sm:$0xf]
      %v2185 = vunpack.c.l.b16 %v2105
      %v2186 = vunpack.c.l.b16 %v2106
      %v2187 = vunpack.c.l.b16 %v2107
      %v2188 = vunpack.c.l.b16 %v2108
      %v2189 = vunpack.c.l.b16 %v2109
      %v2190 = vunpack.c.l.b16 %v2110
      %v2191 = vunpack.c.l.b16 %v2111
      %v2192 = vunpack.c.l.b16 %v2112
      %v2193 = vunpack.c.l.b16 %v2113
      %v2194 = vunpack.c.l.b16 %v2114
      %v2195 = vunpack.c.l.b16 %v2115
      %v2196 = vunpack.c.l.b16 %v2116
      %v2197 = vunpack.c.l.b16 %v2117
      %v2198 = vunpack.c.l.b16 %v2118
      %v2199 = vunpack.c.l.b16 %v2119
      %v2200 = vunpack.c.l.b16 %v2120
      %v2201 = vunpack.c.l.b16 %v2121
      %v2202 = vunpack.c.l.b16 %v2122
      %v2203 = vunpack.c.l.b16 %v2123
      %v2204 = vunpack.c.l.b16 %v2124
      %v2205 = vunpack.c.l.b16 %v2125
      %v2206 = vunpack.c.l.b16 %v2126
      %v2207 = vunpack.c.l.b16 %v2127
      %v2208 = vunpack.c.l.b16 %v2128
      %v2209 = vunpack.c.l.b16 %v2129
      %v2210 = vunpack.c.l.b16 %v2130
      %v2211 = vunpack.c.l.b16 %v2131
      %v2212 = vunpack.c.l.b16 %v2132
      %v2213 = vunpack.c.l.b16 %v2133
      %v2214 = vunpack.c.l.b16 %v2134
      %v2215 = vunpack.c.l.b16 %v2135
      %v2216 = vunpack.c.l.b16 %v2136
      %v2217 = vunpack.c.l.b16 %v2137
      %v2218 = vunpack.c.l.b16 %v2138
      %v2219 = vunpack.c.l.b16 %v2139
      %v2220 = vunpack.c.l.b16 %v2140
      %v2221 = vunpack.c.l.b16 %v2141
      %v2222 = vunpack.c.l.b16 %v2142
      %v2223 = vunpack.c.l.b16 %v2143
      %v2224 = vunpack.c.l.b16 %v2144
      %v2225 = vpack.c.b16 %v2186, %v2185
      %v2226 = vpack.c.b16 %v2188, %v2187
      %v2227 = vpack.c.b16 %v2190, %v2189
      %v2228 = vpack.c.b16 %v2192, %v2191
      %v2229 = vpack.c.b16 %v2194, %v2193
      %v2230 = vpack.c.b16 %v2196, %v2195
      %v2231 = vpack.c.b16 %v2198, %v2197
      %v2232 = vpack.c.b16 %v2200, %v2199
      %v2233 = vpack.c.b16 %v2202, %v2201
      %v2234 = vpack.c.b16 %v2204, %v2203
      %v2235 = vpack.c.b16 %v2206, %v2205
      %v2236 = vpack.c.b16 %v2208, %v2207
      %v2237 = vpack.c.b16 %v2210, %v2209
      %v2238 = vpack.c.b16 %v2212, %v2211
      %v2239 = vpack.c.b16 %v2214, %v2213
      %v2240 = vpack.c.b16 %v2216, %v2215
      %v2241 = vpack.c.b16 %v2218, %v2217
      %v2242 = vpack.c.b16 %v2220, %v2219
      %v2243 = vpack.c.b16 %v2222, %v2221
      %v2244 = vpack.c.b16 %v2224, %v2223
      %vm2265 = vcmask 523264
      %v2267 = vsel %vm2265, %v2099, 0
      %2269 = vmatprep.subr.bf16.mxu0 0
      %2270 = vmatpush1.bf16.msra.mxu0 %v2232
      %2271 = vmatprep.subr.bf16.mxu0 0
      %2272 = vmatpush1.bf16.msra.mxu0 %v2231
      %2273 = vmatprep.subr.bf16.mxu0 0
      %2274 = vmatpush1.bf16.msra.mxu0 %v2230
      %2275 = vmatprep.subr.bf16.mxu0 0
      %2276 = vmatpush1.bf16.msra.mxu0 %v2229
      %2277 = vmatprep.subr.bf16.mxu0 0
      %2278 = vmatpush1.bf16.msra.mxu0 %v2228
      %2279 = vmatprep.subr.bf16.mxu0 0
      %2280 = vmatpush1.bf16.msra.mxu0 %v2227
      %2281 = vmatprep.subr.bf16.mxu0 0
      %2282 = vmatpush1.bf16.msra.mxu0 %v2226
      %2283 = vmatprep.subr.bf16.mxu0 0
      %2284 = vmatpush1.bf16.msra.mxu0 %v2225
      %2285 = vmatprep.subr.bf16.mxu0 0
      %2286 = vmatpush2.bf16.msra.mxu0 %v2240
      %2287 = vmatprep.subr.bf16.mxu0 0
      %2288 = vmatpush2.bf16.msra.mxu0 %v2239
      %2289 = vmatprep.subr.bf16.mxu0 0
      %2290 = vmatpush2.bf16.msra.mxu0 %v2238
      %2291 = vmatprep.subr.bf16.mxu0 0
      %2292 = vmatpush2.bf16.msra.mxu0 %v2237
      %2293 = vmatprep.subr.bf16.mxu0 0
      %2294 = vmatpush2.bf16.msra.mxu0 %v2236
      %2295 = vmatprep.subr.bf16.mxu0 0
      %2296 = vmatpush2.bf16.msra.mxu0 %v2235
      %2297 = vmatprep.subr.bf16.mxu0 0
      %2298 = vmatpush2.bf16.msra.mxu0 %v2234
      %2299 = vmatprep.subr.bf16.mxu0 0
      %2300 = vmatpush2.bf16.msra.mxu0 %v2233
      %2301 = vmatprep.mubr.bf16.mxu0 %v2098
      %2302 = vmatmul.mubr.bf16.gmra.mxu0 %v2097
      %v2303 = vpop.f32.mrf.mxu0
      %v2304 = vadd.f32 0.0, %v2303
      %v2305 = vpop.f32.mrf.mxu0
      %v2306 = vpop.f32.mrf.mxu0
      %v2307 = vadd.f32 0.0, %v2306
      %v2308 = vpop.f32.mrf.mxu0
      %2309 = vdwg.mxu0
      %2310 = vmatprep.subr.bf16.mxu0 0
      %2311 = vmatpush1.bf16.msra.mxu0 0
      %2312 = vmatprep.subr.bf16.mxu0 0
      %2313 = vmatpush1.bf16.msra.mxu0 0
      %2314 = vmatprep.subr.bf16.mxu0 0
      %2315 = vmatpush1.bf16.msra.mxu0 0
      %2316 = vmatprep.subr.bf16.mxu0 0
      %2317 = vmatpush1.bf16.msra.mxu0 0
      %2318 = vmatprep.subr.bf16.mxu0 0
      %2319 = vmatpush1.bf16.msra.mxu0 %v2244
      %2320 = vmatprep.subr.bf16.mxu0 0
      %2321 = vmatpush1.bf16.msra.mxu0 %v2243
      %2322 = vmatprep.subr.bf16.mxu0 0
      %2323 = vmatpush1.bf16.msra.mxu0 %v2242
      %2324 = vmatprep.subr.bf16.mxu0 0
      %2325 = vmatpush1.bf16.msra.mxu0 %v2241
      %2326 = vmatprep.subr.bf16.mxu0 0
      %2327 = vmatpush2.bf16.msra.mxu0 0
      %2328 = vmatprep.subr.bf16.mxu0 0
      %2329 = vmatpush2.bf16.msra.mxu0 0
      %2330 = vmatprep.subr.bf16.mxu0 0
      %2331 = vmatpush2.bf16.msra.mxu0 0
      %2332 = vmatprep.subr.bf16.mxu0 0
      %2333 = vmatpush2.bf16.msra.mxu0 0
      %2334 = vmatprep.subr.bf16.mxu0 0
      %2335 = vmatpush2.bf16.msra.mxu0 0
      %2336 = vmatprep.subr.bf16.mxu0 0
      %2337 = vmatpush2.bf16.msra.mxu0 0
      %2338 = vmatprep.subr.bf16.mxu0 0
      %2339 = vmatpush2.bf16.msra.mxu0 0
      %2340 = vmatprep.subr.bf16.mxu0 0
      %2341 = vmatpush2.bf16.msra.mxu0 0
      %2342 = vmatprep.mubr.bf16.mxu0 0
      %2343 = vmatmul.mubr.bf16.gmra.mxu0 %v2267
      %v2344 = vpop.f32.mrf.mxu0
      %v2345 = vadd.f32 %v2304, %v2344
      %v2346 = vpop.f32.mrf.mxu0
      %v2347 = vpop.f32.mrf.mxu0
      %v2348 = vadd.f32 %v2307, %v2347
      %v2349 = vpop.f32.mrf.mxu0
      %2350 = vdwg.mxu0
      %v2351 = vadd.f32 %v2100, %v2345
      %v2352 = vadd.f32 %v2101, %v2348
      %2353 = vst.msk [vmem:[#allocation3] sm:$0xff] %vm628, %v2351
      %2354 = vst.msk [vmem:[#allocation3 + $0x8] sm:$0xff] %vm628, %v2352
    $region89: #{net_forward.1} parent=1 // loop_footer
      %s636 = sadd.s32 1, %s632
    $region90: #{net_forward.1} parent=1 // loop_footer_branch
      %631 = sbr.rel target = $region86
    $region91: #{net_forward.1} parent=1 // loop_exit
      _
    %v2355 = vld [vmem:[#allocation3] sm:$0xff]
    %v2356 = vld [vmem:[#allocation3 + $0x8] sm:$0xff]
    %v2357 = vld [vmem:[#allocation13] sm:$0x1]
    %v2359 = vlaneseq
    %v2360 = vshrl.u32 %v2359, 7
    %v2361 = vsub.s32 0, %v2360
    %v2362 = vrot.slane %v2357, %v2361
    %v2364 = vadd.f32 %v2355, %v2362
    %v2365 = vadd.f32 %v2356, %v2362
    %v2366 = vmax.f32 %v2364, 0.0
    %v2367 = vmax.f32 %v2365, 0.0
    %v2368 = vld [vmem:[%s7] sm:$0xff]
    %v2369 = vld [vmem:[%s7 + $0x8] sm:$0xff]
    %v2370 = vld [vmem:[%s7 + $0x10] sm:$0xff]
    %v2371 = vld [vmem:[%s7 + $0x18] sm:$0xff]
    %v2372 = vld [vmem:[%s7 + $0x20] sm:$0xff]
    %v2373 = vld [vmem:[%s7 + $0x28] sm:$0xff]
    %v2374 = vld [vmem:[%s7 + $0x30] sm:$0xff]
    %v2375 = vld [vmem:[%s7 + $0x38] sm:$0xff]
    %v2376 = vld [vmem:[%s7 + $0x40] sm:$0xff]
    %v2377 = vld [vmem:[%s7 + $0x48] sm:$0xff]
    %v2378 = vld [vmem:[%s7 + $0x50] sm:$0xff]
    %v2379 = vld [vmem:[%s7 + $0x58] sm:$0xff]
    %v2380 = vld [vmem:[%s7 + $0x60] sm:$0xff]
    %v2381 = vld [vmem:[%s7 + $0x68] sm:$0xff]
    %v2382 = vld [vmem:[%s7 + $0x70] sm:$0xff]
    %v2383 = vld [vmem:[#allocation15] sm:$0x1]
    %v2385 = vlaneseq
    %v2386 = vshrl.u32 %v2385, 7
    %v2387 = vsub.s32 0, %v2386
    %v2388 = vrot.slane %v2383, %v2387
    %v2391 = vsel %vm628, %v2366, 0
    %v2394 = vsel %vm628, %v2367, 0
    %2396 = vmatprep.subr.mxu0 0.0
    %2397 = vmatpush1.msra.mxu0 0.0
    %2398 = vmatprep.subr.mxu0 0.0
    %2399 = vmatpush1.msra.mxu0 %v2382
    %2400 = vmatprep.subr.mxu0 0.0
    %2401 = vmatpush1.msra.mxu0 %v2381
    %2402 = vmatprep.subr.mxu0 0.0
    %2403 = vmatpush1.msra.mxu0 %v2380
    %2404 = vmatprep.subr.mxu0 0.0
    %2405 = vmatpush1.msra.mxu0 %v2379
    %2406 = vmatprep.subr.mxu0 0.0
    %2407 = vmatpush1.msra.mxu0 %v2378
    %2408 = vmatprep.subr.mxu0 0.0
    %2409 = vmatpush1.msra.mxu0 %v2377
    %2410 = vmatprep.subr.mxu0 0.0
    %2411 = vmatpush1.msra.mxu0 %v2376
    %2412 = vmatprep.subr.mxu0 0.0
    %2413 = vmatpush1.msra.mxu0 %v2375
    %2414 = vmatprep.subr.mxu0 0.0
    %2415 = vmatpush1.msra.mxu0 %v2374
    %2416 = vmatprep.subr.mxu0 0.0
    %2417 = vmatpush1.msra.mxu0 %v2373
    %2418 = vmatprep.subr.mxu0 0.0
    %2419 = vmatpush1.msra.mxu0 %v2372
    %2420 = vmatprep.subr.mxu0 0.0
    %2421 = vmatpush1.msra.mxu0 %v2371
    %2422 = vmatprep.subr.mxu0 0.0
    %2423 = vmatpush1.msra.mxu0 %v2370
    %2424 = vmatprep.subr.mxu0 0.0
    %2425 = vmatpush1.msra.mxu0 %v2369
    %2426 = vmatprep.subr.mxu0 0.0
    %2427 = vmatpush1.msra.mxu0 %v2368
    %2428 = vmatprep.subr.mxu0 0.0
    %2429 = vmatpush2.msra.mxu0 0.0
    %2430 = vmatprep.subr.mxu0 0.0
    %2431 = vmatpush2.msra.mxu0 0.0
    %2432 = vmatprep.subr.mxu0 0.0
    %2433 = vmatpush2.msra.mxu0 0.0
    %2434 = vmatprep.subr.mxu0 0.0
    %2435 = vmatpush2.msra.mxu0 0.0
    %2436 = vmatprep.subr.mxu0 0.0
    %2437 = vmatpush2.msra.mxu0 0.0
    %2438 = vmatprep.subr.mxu0 0.0
    %2439 = vmatpush2.msra.mxu0 0.0
    %2440 = vmatprep.subr.mxu0 0.0
    %2441 = vmatpush2.msra.mxu0 0.0
    %2442 = vmatprep.subr.mxu0 0.0
    %2443 = vmatpush2.msra.mxu0 0.0
    %2444 = vmatprep.subr.mxu0 0.0
    %2445 = vmatpush2.msra.mxu0 0.0
    %2446 = vmatprep.subr.mxu0 0.0
    %2447 = vmatpush2.msra.mxu0 0.0
    %2448 = vmatprep.subr.mxu0 0.0
    %2449 = vmatpush2.msra.mxu0 0.0
    %2450 = vmatprep.subr.mxu0 0.0
    %2451 = vmatpush2.msra.mxu0 0.0
    %2452 = vmatprep.subr.mxu0 0.0
    %2453 = vmatpush2.msra.mxu0 0.0
    %2454 = vmatprep.subr.mxu0 0.0
    %2455 = vmatpush2.msra.mxu0 0.0
    %2456 = vmatprep.subr.mxu0 0.0
    %2457 = vmatpush2.msra.mxu0 0.0
    %2458 = vmatprep.subr.mxu0 0.0
    %2459 = vmatpush2.msra.mxu0 0.0
    %2460 = vmatprep.mubr.f32.mxu0 0.0
    %2461 = vmatmul.mubr.f32.gmra.mxu0 %v2391
    %v2462 = vpop.f32.mrf.mxu0
    %v2463 = vadd.f32 %v2388, %v2462
    %v2464 = vpop.f32.mrf.mxu0
    %2465 = vmatprep.mubr.f32.mxu0 0.0
    %2466 = vmatmul.mubr.f32.gmra.mxu0 %v2394
    %v2467 = vpop.f32.mrf.mxu0
    %v2468 = vadd.f32 %v2388, %v2467
    %v2469 = vpop.f32.mrf.mxu0
    %2470 = vdwg.mxu0
    %v2471 = vmax.f32 %v2463, 0.0
    %v2472 = vmax.f32 %v2468, 0.0
    %v2473 = vld [vmem:[%s9] sm:$0xff]
    %v2474 = vld [vmem:[%s9 + $0x8] sm:$0xff]
    %v2475 = vld [vmem:[%s9 + $0x10] sm:$0xff]
    %v2476 = vld [vmem:[%s9 + $0x18] sm:$0xff]
    %v2477 = vld [vmem:[%s9 + $0x20] sm:$0xff]
    %v2478 = vld [vmem:[%s9 + $0x28] sm:$0xff]
    %v2479 = vld [vmem:[%s9 + $0x30] sm:$0xff]
    %v2480 = vld [vmem:[%s9 + $0x38] sm:$0xff]
    %v2481 = vld [vmem:[%s9 + $0x40] sm:$0xff]
    %v2482 = vld [vmem:[%s9 + $0x48] sm:$0xff]
    %v2483 = vld [vmem:[%s9 + $0x50] sm:$0xf]
    %v2484 = vld [vmem:[#allocation16] sm:$0x1]
    %v2486 = vlaneseq
    %v2487 = vshrl.u32 %v2486, 7
    %v2488 = vsub.s32 0, %v2487
    %v2489 = vrot.slane %v2484, %v2488
    %vm2491 = vcmask 687104
    %v2493 = vsel %vm2491, %v2471, 0
    %v2496 = vsel %vm2491, %v2472, 0
    %vm2498 = vcmask 1043456
    %v2500 = vsel %vm2498, %v2483, 0
    %2502 = vmatprep.subr.mxu0 0.0
    %2503 = vmatpush1.msra.mxu0 0.0
    %2504 = vmatprep.subr.mxu0 0.0
    %2505 = vmatpush1.msra.mxu0 0.0
    %2506 = vmatprep.subr.mxu0 0.0
    %2507 = vmatpush1.msra.mxu0 0.0
    %2508 = vmatprep.subr.mxu0 0.0
    %2509 = vmatpush1.msra.mxu0 0.0
    %2510 = vmatprep.subr.mxu0 0.0
    %2511 = vmatpush1.msra.mxu0 0.0
    %2512 = vmatprep.subr.mxu0 0.0
    %2513 = vmatpush1.msra.mxu0 %v2500
    %2514 = vmatprep.subr.mxu0 0.0
    %2515 = vmatpush1.msra.mxu0 %v2482
    %2516 = vmatprep.subr.mxu0 0.0
    %2517 = vmatpush1.msra.mxu0 %v2481
    %2518 = vmatprep.subr.mxu0 0.0
    %2519 = vmatpush1.msra.mxu0 %v2480
    %2520 = vmatprep.subr.mxu0 0.0
    %2521 = vmatpush1.msra.mxu0 %v2479
    %2522 = vmatprep.subr.mxu0 0.0
    %2523 = vmatpush1.msra.mxu0 %v2478
    %2524 = vmatprep.subr.mxu0 0.0
    %2525 = vmatpush1.msra.mxu0 %v2477
    %2526 = vmatprep.subr.mxu0 0.0
    %2527 = vmatpush1.msra.mxu0 %v2476
    %2528 = vmatprep.subr.mxu0 0.0
    %2529 = vmatpush1.msra.mxu0 %v2475
    %2530 = vmatprep.subr.mxu0 0.0
    %2531 = vmatpush1.msra.mxu0 %v2474
    %2532 = vmatprep.subr.mxu0 0.0
    %2533 = vmatpush1.msra.mxu0 %v2473
    %2534 = vmatprep.subr.mxu0 0.0
    %2535 = vmatpush2.msra.mxu0 0.0
    %2536 = vmatprep.subr.mxu0 0.0
    %2537 = vmatpush2.msra.mxu0 0.0
    %2538 = vmatprep.subr.mxu0 0.0
    %2539 = vmatpush2.msra.mxu0 0.0
    %2540 = vmatprep.subr.mxu0 0.0
    %2541 = vmatpush2.msra.mxu0 0.0
    %2542 = vmatprep.subr.mxu0 0.0
    %2543 = vmatpush2.msra.mxu0 0.0
    %2544 = vmatprep.subr.mxu0 0.0
    %2545 = vmatpush2.msra.mxu0 0.0
    %2546 = vmatprep.subr.mxu0 0.0
    %2547 = vmatpush2.msra.mxu0 0.0
    %2548 = vmatprep.subr.mxu0 0.0
    %2549 = vmatpush2.msra.mxu0 0.0
    %2550 = vmatprep.subr.mxu0 0.0
    %2551 = vmatpush2.msra.mxu0 0.0
    %2552 = vmatprep.subr.mxu0 0.0
    %2553 = vmatpush2.msra.mxu0 0.0
    %2554 = vmatprep.subr.mxu0 0.0
    %2555 = vmatpush2.msra.mxu0 0.0
    %2556 = vmatprep.subr.mxu0 0.0
    %2557 = vmatpush2.msra.mxu0 0.0
    %2558 = vmatprep.subr.mxu0 0.0
    %2559 = vmatpush2.msra.mxu0 0.0
    %2560 = vmatprep.subr.mxu0 0.0
    %2561 = vmatpush2.msra.mxu0 0.0
    %2562 = vmatprep.subr.mxu0 0.0
    %2563 = vmatpush2.msra.mxu0 0.0
    %2564 = vmatprep.subr.mxu0 0.0
    %2565 = vmatpush2.msra.mxu0 0.0
    %2566 = vmatprep.mubr.f32.mxu0 0.0
    %2567 = vmatmul.mubr.f32.gmra.mxu0 %v2493
    %v2568 = vpop.f32.mrf.mxu0
    %v2569 = vadd.f32 %v2489, %v2568
    %v2570 = vpop.f32.mrf.mxu0
    %2571 = vmatprep.mubr.f32.mxu0 0.0
    %2572 = vmatmul.mubr.f32.gmra.mxu0 %v2496
    %v2573 = vpop.f32.mrf.mxu0
    %v2574 = vadd.f32 %v2489, %v2573
    %v2575 = vpop.f32.mrf.mxu0
    %2576 = vdwg.mxu0
    %vm2577 = vcmask 80896
    %2578 = vst.msk [vmem:[#allocation18] sm:$0xff] %vm2577, %v2569
    %2579 = vst.msk [vmem:[#allocation18 + $0x8] sm:$0xff] %vm2577, %v2574
    // Predicated region
    $region92: #{net_forward.1} parent=1 // pred_check
      _
    $region93: #{net_forward.1} parent=1 // pred_check_branch
      %2581 = sbr.rel (0) target = $region95
    $region94: #{net_forward.1} parent=1 // pred_region
      %s2583 = ssub.s32 256, 256
      %2584 = vsyncadd [#allocation6], %s2583
      %s2585 = sshll.u32 [#allocation18], 4
      %s2586 = int_to_ptr.vmem [resolvable:$true] %s2585
      %2591 = dma.vmem_to_hbm [thread:$0]  %s2586, 256, %s11, [#allocation6], 128, 128, 8
    $region95: #{net_forward.1} parent=1 // pred_fallthru
      _
    // Predicated region
    $region96: #{net_forward.1} parent=1 // pred_check
      _
    $region97: #{net_forward.1} parent=1 // pred_check_branch
      %2593 = sbr.rel (0) target = $region99
    $region98: #{net_forward.1} parent=1 // pred_region
      %2594 = dma.done [#allocation6], 256
    $region99: #{net_forward.1} parent=1 // pred_fallthru
      _
    %2595 = vsyncpa [#allocation5], 1
    %2596 = vsyncpa [#allocation8], 1
    %2597 = vsyncpa [#allocation11], 1
    %2598 = vsyncpa [#allocation14], 1
    %2599 = vsyncpa [#allocation17], 1
    %2600 = vsyncpa [#allocation6], 1

</llo_original>
